<compile_context>
chip_gen: v7x
topology: tpu7x:2x2x1
jax: 0.10.0
libtpu: 0.0.40
codegen_flags: <defaults>
</compile_context>

<pallas_src>
import jax
import jax.numpy as jnp
from jax.experimental import pallas as pl
from jax.experimental.pallas import tpu as pltpu


def _round_up(x, m):
    return ((x + m - 1) // m) * m


def _make_kernel(KH, KW, Wp, L_out):
    """Per-tap accumulated conv kernel (stride-1, 'wide' output grid)."""

    def kernel(x_ref, w_ref, b_ref, o_ref):
        # x_ref : (1, C_in_p, L_seg)  bf16  flat lane-dense input (+ tap halo)
        # w_ref : (T,  C_out, C_in_p) bf16  one MXU tile per tap, scale folded
        # b_ref : (C_out, 1)          f32
        # o_ref : (1, C_out, L_out)   f32   wide output columns (lane-dense)
        acc = None
        t = 0
        for kh in range(KH):
            for kw in range(KW):
                off = kh * Wp + kw                       # static lane offset
                rhs = x_ref[0, :, pl.ds(off, L_out)]     # (C_in_p, L_out) bf16
                part = jnp.dot(w_ref[t], rhs,
                               preferred_element_type=jnp.float32)
                acc = part if acc is None else acc + part
                t += 1
        o_ref[0] = (acc + b_ref[...]).astype(o_ref.dtype)

    return kernel


def equalized_conv2d(x_nchw, weight_oihw, bias, *, stride=1, pad=0, scale=1.0):
    """Forward pass of _equalized_conv2d.

    x_nchw      : (N, C_in, H, W)        float32
    weight_oihw : (C_out, C_in, KH, KW)  float32
    bias        : (C_out,) float32 or None
    Returns     : (N, C_out, H_out, W_out) float32
    """
    N, C_in, H, W = x_nchw.shape
    C_out, _, KH, KW = weight_oihw.shape

    Hp, Wp = H + 2 * pad, W + 2 * pad
    H1, W1 = Hp - KH + 1, Wp - KW + 1            # stride-1 output extent
    H_out = (H + 2 * pad - KH) // stride + 1
    W_out = (W + 2 * pad - KW) // stride + 1

    # Channel padding to a multiple of 16 (bf16 sublane packing); zero channels
    # pair with zero weight rows, so the result is unchanged.
    C_in_p = _round_up(max(C_in, 16), 16)

    # Pack NB images into the lane axis per grid step so small images / small
    # C_out still present >= ~512 lanes to the MXU and reuse the weight.
    NB = max(1, min(N, -(-512 // (Hp * Wp))))
    G = -(-N // NB)
    N_pad = G * NB

    T = KH * KW
    max_off = (KH - 1) * Wp + (KW - 1)           # largest tap lane offset
    L_body = NB * Hp * Wp                        # real output columns / step
    L_out = _round_up(L_body, 128)               # lane-dense output block
    L_seg = _round_up(L_out + max_off, 128)      # input block incl. tap halo

    # ---- wrapper-side layout plumbing (HBM reshapes/pads, done once) ----
    x_p = jnp.pad(
        x_nchw.astype(jnp.float32),
        ((0, N_pad - N), (0, C_in_p - C_in), (pad, pad), (pad, pad)),
    )
    # (N_pad, C_in_p, Hp, Wp) -> (G, C_in_p, NB*Hp*Wp): channels on sublanes,
    # batch-within-group and flat spatial on the lane axis.
    x_g = (x_p.reshape(G, NB, C_in_p, Hp * Wp)
               .transpose(0, 2, 1, 3)
               .reshape(G, C_in_p, NB * Hp * Wp))
    x_g = jnp.pad(x_g, ((0, 0), (0, 0), (0, L_seg - NB * Hp * Wp)))
    x_g = x_g.astype(jnp.bfloat16)

    # Equalized-LR scale folded into the weight once (bias stays unscaled),
    # then one (C_out, C_in_p) tile per tap, ordered (kh, kw).
    w_p = jnp.pad(
        weight_oihw.astype(jnp.float32) * float(scale),
        ((0, 0), (0, C_in_p - C_in), (0, 0), (0, 0)),
    )
    w_t = (jnp.transpose(w_p, (2, 3, 0, 1))      # (KH, KW, C_out, C_in_p)
               .reshape(T, C_out, C_in_p)
               .astype(jnp.bfloat16))

    if bias is None:
        bias = jnp.zeros((C_out,), jnp.float32)
    b2d = bias.astype(jnp.float32).reshape(C_out, 1)

    kernel = _make_kernel(KH, KW, Wp, L_out)

    flops = 2 * G * T * C_out * C_in_p * L_out
    bytes_accessed = (x_g.size * 2 + w_t.size * 2 + b2d.size * 4
                      + G * C_out * L_out * 4)

    out_wide = pl.pallas_call(
        kernel,
        out_shape=jax.ShapeDtypeStruct((G, C_out, L_out), jnp.float32),
        grid_spec=pltpu.PrefetchScalarGridSpec(
            num_scalar_prefetch=0,
            grid=(G,),
            in_specs=[
                pl.BlockSpec((1, C_in_p, L_seg), lambda g: (g, 0, 0)),
                pl.BlockSpec((T, C_out, C_in_p), lambda g: (0, 0, 0)),
                pl.BlockSpec((C_out, 1), lambda g: (0, 0)),
            ],
            out_specs=pl.BlockSpec((1, C_out, L_out), lambda g: (g, 0, 0)),
        ),
        compiler_params=pltpu.CompilerParams(
            dimension_semantics=("parallel",),
        ),
        cost_estimate=pl.CostEstimate(
            flops=flops, transcendentals=0, bytes_accessed=bytes_accessed),
    )(x_g, w_t, b2d)

    # (G, C_out, L_out) -> (N, C_out, H_out, W_out): drop lane padding, split
    # group/batch, keep valid rows/cols, apply stride by subsampling.
    out = (out_wide[:, :, :NB * Hp * Wp]
           .reshape(G, C_out, NB, Hp, Wp)
           .transpose(0, 2, 1, 3, 4)
           .reshape(N_pad, C_out, Hp, Wp)[:N, :, :H1:stride, :W1:stride])
    assert out.shape == (N, C_out, H_out, W_out)
    return out


if __name__ == "__main__":
    # Module hyper-params (synthetic, deterministic init).
    c_in, c_out, k_size, stride, pad, use_bias = 4, 8, 3, 1, 1, True
    fan_in = k_size * k_size * c_in
    scale = float(jnp.sqrt(2.0) / jnp.sqrt(float(fan_in)))

    key = jax.random.PRNGKey(0)
    k_w, k_x = jax.random.split(key)

    # nn.init.normal_ weight, zero bias (as in the PyTorch module).
    weight = jax.random.normal(k_w, (c_out, c_in, k_size, k_size), jnp.float32)
    bias = jnp.zeros((c_out,), jnp.float32) if use_bias else None

    # Input: batch=2, channels=4, spatial=16 (NCHW, matching PyTorch).
    x = jax.random.normal(k_x, (2, c_in, 16, 16), jnp.float32)

    y = equalized_conv2d(x, weight, bias, stride=stride, pad=pad, scale=scale)
    y = jax.block_until_ready(y)
    assert y.shape == (2, c_out, 16, 16), y.shape

    # Matched-precision reference: identical bf16 rounding of the operands,
    # f32 accumulation (Precision.HIGHEST) -- tight tolerance.
    w_bf = (weight * scale).astype(jnp.bfloat16).astype(jnp.float32)
    x_bf = x.astype(jnp.bfloat16).astype(jnp.float32)
    y_ref = jax.lax.conv_general_dilated(
        x_bf, w_bf,
        window_strides=(stride, stride),
        padding=[(pad, pad), (pad, pad)],
        dimension_numbers=("NCHW", "OIHW", "NCHW"),
        precision=jax.lax.Precision.HIGHEST,
    ) + bias.reshape(1, c_out, 1, 1)
    err = float(jnp.max(jnp.abs(y - y_ref)))
    assert jnp.allclose(y, y_ref, atol=2e-3, rtol=2e-3), err

    # Loose sanity check against the full-f32 module semantics (bf16 operand
    # rounding is the only difference).
    y_f32 = jax.lax.conv_general_dilated(
        x, weight * scale,
        window_strides=(stride, stride),
        padding=[(pad, pad), (pad, pad)],
        dimension_numbers=("NCHW", "OIHW", "NCHW"),
        precision=jax.lax.Precision.HIGHEST,
    ) + bias.reshape(1, c_out, 1, 1)
    err32 = float(jnp.max(jnp.abs(y - y_f32)))
    assert jnp.allclose(y, y_f32, atol=1e-1, rtol=5e-2), err32

    print("KERNEL_OK")
</pallas_src>

<mosaic_0001>
module attributes {stable_mosaic.version = 11 : i64} {
  func.func @kernel(%arg0: i32, %arg1: memref<1x16x896xbf16, #tpu.memory_space<vmem>>, %arg2: memref<9x8x16xbf16, #tpu.memory_space<vmem>>, %arg3: memref<8x1xf32, #tpu.memory_space<vmem>>, %arg4: memref<1x8x768xf32, #tpu.memory_space<vmem>>) attributes {dimension_semantics = [#tpu.dimension_semantics<parallel>], iteration_bounds = array<i64: 1>, scalar_prefetch = 0 : i64, scratch_operands = 0 : i64, tpu.core_type = #tpu.core_type<tc>, window_params = [{transform_indices = @transform_0, window_bounds = array<i64: 1, 16, 896>}, {pipeline_mode = #tpu.pipeline_mode<synchronous>, transform_indices = @transform_1, window_bounds = array<i64: 9, 8, 16>}, {pipeline_mode = #tpu.pipeline_mode<synchronous>, transform_indices = @transform_2, window_bounds = array<i64: 8, 1>}, {transform_indices = @transform_3, window_bounds = array<i64: 1, 8, 768>}]} {
    %c0 = arith.constant 0 : index
    %c0_0 = arith.constant 0 : index
    %c0_1 = arith.constant 0 : index
    %0 = vector.load %arg1[%c0, %c0_0, %c0_1] : memref<1x16x896xbf16, #tpu.memory_space<vmem>>, vector<1x16x768xbf16>
    %1 = vector.shape_cast %0 : vector<1x16x768xbf16> to vector<16x768xbf16>
    %c0_2 = arith.constant 0 : index
    %c0_3 = arith.constant 0 : index
    %c0_4 = arith.constant 0 : index
    %2 = vector.load %arg2[%c0_2, %c0_3, %c0_4] : memref<9x8x16xbf16, #tpu.memory_space<vmem>>, vector<1x8x16xbf16>
    %3 = vector.shape_cast %2 : vector<1x8x16xbf16> to vector<8x16xbf16>
    %cst = arith.constant dense<0.000000e+00> : vector<8x768xf32>
    %4 = tpu.matmul %3, %1, %cst {dimension_numbers = #tpu.dot_dimension_numbers<[1], [0], [0], [1], [0, 0, 1, 1], [], []>} : vector<8x16xbf16>, vector<16x768xbf16>, vector<8x768xf32> -> vector<8x768xf32>
    %c0_5 = arith.constant 0 : index
    %c0_6 = arith.constant 0 : index
    %c1 = arith.constant 1 : index
    %5 = vector.load %arg1[%c0_5, %c0_6, %c1] : memref<1x16x896xbf16, #tpu.memory_space<vmem>>, vector<1x16x768xbf16>
    %6 = vector.shape_cast %5 : vector<1x16x768xbf16> to vector<16x768xbf16>
    %c1_7 = arith.constant 1 : index
    %c0_8 = arith.constant 0 : index
    %c0_9 = arith.constant 0 : index
    %7 = vector.load %arg2[%c1_7, %c0_8, %c0_9] : memref<9x8x16xbf16, #tpu.memory_space<vmem>>, vector<1x8x16xbf16>
    %8 = vector.shape_cast %7 : vector<1x8x16xbf16> to vector<8x16xbf16>
    %cst_10 = arith.constant dense<0.000000e+00> : vector<8x768xf32>
    %9 = tpu.matmul %8, %6, %cst_10 {dimension_numbers = #tpu.dot_dimension_numbers<[1], [0], [0], [1], [0, 0, 1, 1], [], []>} : vector<8x16xbf16>, vector<16x768xbf16>, vector<8x768xf32> -> vector<8x768xf32>
    %10 = arith.addf %4, %9 : vector<8x768xf32>
    %c0_11 = arith.constant 0 : index
    %c0_12 = arith.constant 0 : index
    %c2 = arith.constant 2 : index
    %11 = vector.load %arg1[%c0_11, %c0_12, %c2] : memref<1x16x896xbf16, #tpu.memory_space<vmem>>, vector<1x16x768xbf16>
    %12 = vector.shape_cast %11 : vector<1x16x768xbf16> to vector<16x768xbf16>
    %c2_13 = arith.constant 2 : index
    %c0_14 = arith.constant 0 : index
    %c0_15 = arith.constant 0 : index
    %13 = vector.load %arg2[%c2_13, %c0_14, %c0_15] : memref<9x8x16xbf16, #tpu.memory_space<vmem>>, vector<1x8x16xbf16>
    %14 = vector.shape_cast %13 : vector<1x8x16xbf16> to vector<8x16xbf16>
    %cst_16 = arith.constant dense<0.000000e+00> : vector<8x768xf32>
    %15 = tpu.matmul %14, %12, %cst_16 {dimension_numbers = #tpu.dot_dimension_numbers<[1], [0], [0], [1], [0, 0, 1, 1], [], []>} : vector<8x16xbf16>, vector<16x768xbf16>, vector<8x768xf32> -> vector<8x768xf32>
    %16 = arith.addf %10, %15 : vector<8x768xf32>
    %c0_17 = arith.constant 0 : index
    %c0_18 = arith.constant 0 : index
    %c18 = arith.constant 18 : index
    %17 = vector.load %arg1[%c0_17, %c0_18, %c18] : memref<1x16x896xbf16, #tpu.memory_space<vmem>>, vector<1x16x768xbf16>
    %18 = vector.shape_cast %17 : vector<1x16x768xbf16> to vector<16x768xbf16>
    %c3 = arith.constant 3 : index
    %c0_19 = arith.constant 0 : index
    %c0_20 = arith.constant 0 : index
    %19 = vector.load %arg2[%c3, %c0_19, %c0_20] : memref<9x8x16xbf16, #tpu.memory_space<vmem>>, vector<1x8x16xbf16>
    %20 = vector.shape_cast %19 : vector<1x8x16xbf16> to vector<8x16xbf16>
    %cst_21 = arith.constant dense<0.000000e+00> : vector<8x768xf32>
    %21 = tpu.matmul %20, %18, %cst_21 {dimension_numbers = #tpu.dot_dimension_numbers<[1], [0], [0], [1], [0, 0, 1, 1], [], []>} : vector<8x16xbf16>, vector<16x768xbf16>, vector<8x768xf32> -> vector<8x768xf32>
    %22 = arith.addf %16, %21 : vector<8x768xf32>
    %c0_22 = arith.constant 0 : index
    %c0_23 = arith.constant 0 : index
    %c19 = arith.constant 19 : index
    %23 = vector.load %arg1[%c0_22, %c0_23, %c19] : memref<1x16x896xbf16, #tpu.memory_space<vmem>>, vector<1x16x768xbf16>
    %24 = vector.shape_cast %23 : vector<1x16x768xbf16> to vector<16x768xbf16>
    %c4 = arith.constant 4 : index
    %c0_24 = arith.constant 0 : index
    %c0_25 = arith.constant 0 : index
    %25 = vector.load %arg2[%c4, %c0_24, %c0_25] : memref<9x8x16xbf16, #tpu.memory_space<vmem>>, vector<1x8x16xbf16>
    %26 = vector.shape_cast %25 : vector<1x8x16xbf16> to vector<8x16xbf16>
    %cst_26 = arith.constant dense<0.000000e+00> : vector<8x768xf32>
    %27 = tpu.matmul %26, %24, %cst_26 {dimension_numbers = #tpu.dot_dimension_numbers<[1], [0], [0], [1], [0, 0, 1, 1], [], []>} : vector<8x16xbf16>, vector<16x768xbf16>, vector<8x768xf32> -> vector<8x768xf32>
    %28 = arith.addf %22, %27 : vector<8x768xf32>
    %c0_27 = arith.constant 0 : index
    %c0_28 = arith.constant 0 : index
    %c20 = arith.constant 20 : index
    %29 = vector.load %arg1[%c0_27, %c0_28, %c20] : memref<1x16x896xbf16, #tpu.memory_space<vmem>>, vector<1x16x768xbf16>
    %30 = vector.shape_cast %29 : vector<1x16x768xbf16> to vector<16x768xbf16>
    %c5 = arith.constant 5 : index
    %c0_29 = arith.constant 0 : index
    %c0_30 = arith.constant 0 : index
    %31 = vector.load %arg2[%c5, %c0_29, %c0_30] : memref<9x8x16xbf16, #tpu.memory_space<vmem>>, vector<1x8x16xbf16>
    %32 = vector.shape_cast %31 : vector<1x8x16xbf16> to vector<8x16xbf16>
    %cst_31 = arith.constant dense<0.000000e+00> : vector<8x768xf32>
    %33 = tpu.matmul %32, %30, %cst_31 {dimension_numbers = #tpu.dot_dimension_numbers<[1], [0], [0], [1], [0, 0, 1, 1], [], []>} : vector<8x16xbf16>, vector<16x768xbf16>, vector<8x768xf32> -> vector<8x768xf32>
    %34 = arith.addf %28, %33 : vector<8x768xf32>
    %c0_32 = arith.constant 0 : index
    %c0_33 = arith.constant 0 : index
    %c36 = arith.constant 36 : index
    %35 = vector.load %arg1[%c0_32, %c0_33, %c36] : memref<1x16x896xbf16, #tpu.memory_space<vmem>>, vector<1x16x768xbf16>
    %36 = vector.shape_cast %35 : vector<1x16x768xbf16> to vector<16x768xbf16>
    %c6 = arith.constant 6 : index
    %c0_34 = arith.constant 0 : index
    %c0_35 = arith.constant 0 : index
    %37 = vector.load %arg2[%c6, %c0_34, %c0_35] : memref<9x8x16xbf16, #tpu.memory_space<vmem>>, vector<1x8x16xbf16>
    %38 = vector.shape_cast %37 : vector<1x8x16xbf16> to vector<8x16xbf16>
    %cst_36 = arith.constant dense<0.000000e+00> : vector<8x768xf32>
    %39 = tpu.matmul %38, %36, %cst_36 {dimension_numbers = #tpu.dot_dimension_numbers<[1], [0], [0], [1], [0, 0, 1, 1], [], []>} : vector<8x16xbf16>, vector<16x768xbf16>, vector<8x768xf32> -> vector<8x768xf32>
    %40 = arith.addf %34, %39 : vector<8x768xf32>
    %c0_37 = arith.constant 0 : index
    %c0_38 = arith.constant 0 : index
    %c37 = arith.constant 37 : index
    %41 = vector.load %arg1[%c0_37, %c0_38, %c37] : memref<1x16x896xbf16, #tpu.memory_space<vmem>>, vector<1x16x768xbf16>
    %42 = vector.shape_cast %41 : vector<1x16x768xbf16> to vector<16x768xbf16>
    %c7 = arith.constant 7 : index
    %c0_39 = arith.constant 0 : index
    %c0_40 = arith.constant 0 : index
    %43 = vector.load %arg2[%c7, %c0_39, %c0_40] : memref<9x8x16xbf16, #tpu.memory_space<vmem>>, vector<1x8x16xbf16>
    %44 = vector.shape_cast %43 : vector<1x8x16xbf16> to vector<8x16xbf16>
    %cst_41 = arith.constant dense<0.000000e+00> : vector<8x768xf32>
    %45 = tpu.matmul %44, %42, %cst_41 {dimension_numbers = #tpu.dot_dimension_numbers<[1], [0], [0], [1], [0, 0, 1, 1], [], []>} : vector<8x16xbf16>, vector<16x768xbf16>, vector<8x768xf32> -> vector<8x768xf32>
    %46 = arith.addf %40, %45 : vector<8x768xf32>
    %c0_42 = arith.constant 0 : index
    %c0_43 = arith.constant 0 : index
    %c38 = arith.constant 38 : index
    %47 = vector.load %arg1[%c0_42, %c0_43, %c38] : memref<1x16x896xbf16, #tpu.memory_space<vmem>>, vector<1x16x768xbf16>
    %48 = vector.shape_cast %47 : vector<1x16x768xbf16> to vector<16x768xbf16>
    %c8 = arith.constant 8 : index
    %c0_44 = arith.constant 0 : index
    %c0_45 = arith.constant 0 : index
    %49 = vector.load %arg2[%c8, %c0_44, %c0_45] : memref<9x8x16xbf16, #tpu.memory_space<vmem>>, vector<1x8x16xbf16>
    %50 = vector.shape_cast %49 : vector<1x8x16xbf16> to vector<8x16xbf16>
    %cst_46 = arith.constant dense<0.000000e+00> : vector<8x768xf32>
    %51 = tpu.matmul %50, %48, %cst_46 {dimension_numbers = #tpu.dot_dimension_numbers<[1], [0], [0], [1], [0, 0, 1, 1], [], []>} : vector<8x16xbf16>, vector<16x768xbf16>, vector<8x768xf32> -> vector<8x768xf32>
    %52 = arith.addf %46, %51 : vector<8x768xf32>
    %c0_47 = arith.constant 0 : index
    %c0_48 = arith.constant 0 : index
    %53 = vector.load %arg3[%c0_47, %c0_48] : memref<8x1xf32, #tpu.memory_space<vmem>>, vector<8x1xf32>
    %54 = vector.broadcast %53 : vector<8x1xf32> to vector<8x768xf32>
    %55 = arith.addf %52, %54 : vector<8x768xf32>
    %c0_49 = arith.constant 0 : index
    %c0_50 = arith.constant 0 : index
    %c0_51 = arith.constant 0 : index
    %56 = vector.load %arg4[%c0_49, %c0_50, %c0_51] : memref<1x8x768xf32, #tpu.memory_space<vmem>>, vector<1x8x768xf32>
    %57 = vector.shape_cast %56 : vector<1x8x768xf32> to vector<8x768xf32>
    %58 = vector.shape_cast %55 : vector<8x768xf32> to vector<1x8x768xf32>
    tpu.vector_store %arg4[%c0_49, %c0_50, %c0_51], %58 {strides = array<i32>} : memref<1x8x768xf32, #tpu.memory_space<vmem>>, vector<1x8x768xf32>,
    return
  }
  func.func @transform_0(%arg0: i32) -> (i32, i32, i32) {
    %c0_i32 = arith.constant 0 : i32
    %c0_i32_0 = arith.constant 0 : i32
    %c0_i32_1 = arith.constant 0 : i32
    return %arg0, %c0_i32, %c0_i32_0 : i32, i32, i32
  }
  func.func @transform_1(%arg0: i32) -> (i32, i32, i32) {
    %c0_i32 = arith.constant 0 : i32
    %c0_i32_0 = arith.constant 0 : i32
    %c0_i32_1 = arith.constant 0 : i32
    %c0_i32_2 = arith.constant 0 : i32
    return %c0_i32, %c0_i32_0, %c0_i32_1 : i32, i32, i32
  }
  func.func @transform_2(%arg0: i32) -> (i32, i32) {
    %c0_i32 = arith.constant 0 : i32
    %c0_i32_0 = arith.constant 0 : i32
    %c0_i32_1 = arith.constant 0 : i32
    return %c0_i32, %c0_i32_0 : i32, i32
  }
  func.func @transform_3(%arg0: i32) -> (i32, i32, i32) {
    %c0_i32 = arith.constant 0 : i32
    %c0_i32_0 = arith.constant 0 : i32
    %c0_i32_1 = arith.constant 0 : i32
    return %arg0, %c0_i32, %c0_i32_0 : i32, i32, i32
  }
}

</mosaic_0001>

<llo_original>
// kernel: tpu_custom_call.1
$region0: #{tpu_custom_call.1}
  #allocation0 [shape = 'u32[]', space=smem, size = 0x4, offset = 0x4, fixed_abs, tag = 'smem constant byte address 0x4 - core index']
  #allocation1 [shape = 'u32[144,128]{1,0:T(1,128)}', space=vmem, size = 0x12000, scoped, tag = 'internal scratch']
  %s0 = inlined_call_operand.hbm [shape: bf16[1,16,896], index: 0, kind: input, shape index: {}]
  %s1 = inlined_call_operand.hbm [shape: bf16[9,8,16], index: 1, kind: input, shape index: {}]
  %s2 = inlined_call_operand.vmem [shape: f32[8,1], index: 2, kind: input, shape index: {}]
  %s3 = inlined_call_operand.hbm [shape: f32[1,8,768], index: 3, kind: output, shape index: {}]
  %s4 = sld [smem:[#allocation0]]
  $region30: #{tpu_custom_call.1} parent=0
    _
  %s6 = ssub.s32 1, %s4
  %s7 = scalar_select 0, %s6, %s4
  $region1: #{tpu_custom_call.1} parent=0
    #allocation2 [shape = 'u8[28672]{0}', space=vmem, size = 0x7000, scoped, tag = 'input window, operand 0, single buffered']
    #allocation3 [shape = 's32[1]{0}', space=sflag, size = 0x4, scoped, tag = 'scoped memory for tpu_custom_call.1']
    #allocation4 [shape = 's32[1]{0}', space=sflag, size = 0x4, scoped, tag = 'scoped memory for tpu_custom_call.1']
    #allocation5 [shape = 'u8[18432]{0}', space=vmem, size = 0x4800, scoped, tag = 'input window, operand 1, single buffered']
    #allocation6 [shape = 's32[1]{0}', space=sflag, size = 0x4, scoped, tag = 'scoped memory for tpu_custom_call.1']
    #allocation7 [shape = 'u8[24576]{0}', space=vmem, size = 0x6000, scoped, tag = 'output window, operand 0, single buffered']
    %8 = vsyncpa [#allocation3], 0
    %9 = vsyncpa [#allocation6], 0
    %10 = vsyncpa [#allocation4], 0
    // Predicated region
    $region2: #{tpu_custom_call.1} parent=1 // pred_check
      _
    $region3: #{tpu_custom_call.1} parent=1 // pred_check_branch
      %12 = sbr.rel (0) target = $region5
    $region4: #{tpu_custom_call.1} parent=1 // pred_region
      %s14 = ssub.s32 896, 896
      %15 = vsyncadd [#allocation3], %s14
      %s16 = sshll.u32 [#allocation2], 4
      %s17 = int_to_ptr.vmem [resolvable:$true] %s16
      %22 = dma.hbm_to_vmem [thread:$0]  %s0, 896, %s17, [#allocation3], 448, 448, 28
    $region5: #{tpu_custom_call.1} parent=1 // pred_fallthru
      _
    // Predicated region
    $region6: #{tpu_custom_call.1} parent=1 // pred_check
      _
    $region7: #{tpu_custom_call.1} parent=1 // pred_check_branch
      %24 = sbr.rel (0) target = $region9
    $region8: #{tpu_custom_call.1} parent=1 // pred_region
      %s26 = ssub.s32 576, 576
      %27 = vsyncadd [#allocation6], %s26
      %s28 = sshll.u32 [#allocation5], 4
      %s29 = int_to_ptr.vmem [resolvable:$true] %s28
      %34 = dma.hbm_to_vmem [thread:$0]  %s1, 576, %s29, [#allocation6], 64, 64, 4
    $region9: #{tpu_custom_call.1} parent=1 // pred_fallthru
      _
    // Predicated region
    $region10: #{tpu_custom_call.1} parent=1 // pred_check
      _
    $region11: #{tpu_custom_call.1} parent=1 // pred_check_branch
      %36 = sbr.rel (0) target = $region13
    $region12: #{tpu_custom_call.1} parent=1 // pred_region
      _
    $region13: #{tpu_custom_call.1} parent=1 // pred_fallthru
      _
    // Predicated region
    $region14: #{tpu_custom_call.1} parent=1 // pred_check
      _
    $region15: #{tpu_custom_call.1} parent=1 // pred_check_branch
      %38 = sbr.rel (0) target = $region17
    $region16: #{tpu_custom_call.1} parent=1 // pred_region
      %39 = dma.done [#allocation3], 896
    $region17: #{tpu_custom_call.1} parent=1 // pred_fallthru
      _
    // Predicated region
    $region18: #{tpu_custom_call.1} parent=1 // pred_check
      _
    $region19: #{tpu_custom_call.1} parent=1 // pred_check_branch
      %41 = sbr.rel (0) target = $region21
    $region20: #{tpu_custom_call.1} parent=1 // pred_region
      %42 = dma.done [#allocation6], 576
    $region21: #{tpu_custom_call.1} parent=1 // pred_fallthru
      _
    %v44 = vld [vmem:[#allocation2] sm:$0xff]
    %v45 = vld [vmem:[#allocation2 + $0x8] sm:$0xff]
    %v46 = vld [vmem:[#allocation2 + $0x10] sm:$0xff]
    %v47 = vld [vmem:[#allocation2 + $0x1c] sm:$0xff]
    %v48 = vld [vmem:[#allocation2 + $0x24] sm:$0xff]
    %v49 = vld [vmem:[#allocation2 + $0x2c] sm:$0xff]
    %v50 = vld [vmem:[#allocation5] sm:$0xf]
    %v51 = vld [vmem:[#allocation2] sm:$0xff]
    %v52 = vld [vmem:[#allocation2 + $0x8] sm:$0xff]
    %v53 = vld [vmem:[#allocation2 + $0x10] sm:$0xff]
    %v54 = vld [vmem:[#allocation2 + $0x18] sm:$0xf]
    %v55 = vld [vmem:[#allocation2 + $0x1c] sm:$0xff]
    %v56 = vld [vmem:[#allocation2 + $0x24] sm:$0xff]
    %v57 = vld [vmem:[#allocation2 + $0x2c] sm:$0xff]
    %v58 = vld [vmem:[#allocation2 + $0x34] sm:$0xf]
    %s59 = scalar_lea.vmem [#allocation5], 4
    %v60 = vld [vmem:[%s59] sm:$0xf]
    %v69 = vunpack.c.l.b16 %v51
    %v70 = vunpack.c.h.b16 %v51
    %v71 = vunpack.c.l.b16 %v52
    %v72 = vunpack.c.h.b16 %v52
    %v73 = vunpack.c.l.b16 %v53
    %v74 = vunpack.c.h.b16 %v53
    %v75 = vunpack.c.l.b16 %v54
    %v76 = vunpack.c.l.b16 %v55
    %v77 = vunpack.c.h.b16 %v55
    %v78 = vunpack.c.l.b16 %v56
    %v79 = vunpack.c.h.b16 %v56
    %v80 = vunpack.c.l.b16 %v57
    %v81 = vunpack.c.h.b16 %v57
    %v82 = vunpack.c.l.b16 %v58
    %v83 = vpack.c.b16 %v76, %v69
    %v84 = vpack.c.b16 %v77, %v70
    %v85 = vpack.c.b16 %v78, %v71
    %v86 = vpack.c.b16 %v79, %v72
    %v87 = vpack.c.b16 %v80, %v73
    %v88 = vpack.c.b16 %v81, %v74
    %v89 = vpack.c.b16 %v82, %v75
    %90 = vrot.lane.b32.xlu0 %v83, 127
    %v91 = vpop.permute.xlu0 %90
    %92 = vrot.lane.b32.xlu0 %v84, 127
    %v93 = vpop.permute.xlu0 %92
    %94 = vrot.lane.b32.xlu0 %v85, 127
    %v95 = vpop.permute.xlu0 %94
    %96 = vrot.lane.b32.xlu0 %v86, 127
    %v97 = vpop.permute.xlu0 %96
    %98 = vrot.lane.b32.xlu0 %v87, 127
    %v99 = vpop.permute.xlu0 %98
    %100 = vrot.lane.b32.xlu0 %v88, 127
    %v101 = vpop.permute.xlu0 %100
    %102 = vrot.lane.b32.xlu0 %v89, 127
    %v103 = vpop.permute.xlu0 %102
    %vm104 = vcmask 1039360
    %v105 = vsel %vm104, %v91, %v93
    %v106 = vsel %vm104, %v93, %v95
    %v107 = vsel %vm104, %v95, %v97
    %v108 = vsel %vm104, %v97, %v99
    %v109 = vsel %vm104, %v99, %v101
    %v110 = vsel %vm104, %v101, %v103
    %vm117 = vcmask 130048
    %v119 = vsel %vm117, %v60, 0
    %121 = vmatprep.subr.bf16.mxu0 %v106
    %122 = vmatpush1.bf16.msra.mxu0 %v105
    %123 = vmatprep.subr.bf16.mxu0 0
    %124 = vmatpush1.bf16.msra.mxu0 0
    %125 = vmatprep.subr.bf16.mxu0 0
    %126 = vmatpush1.bf16.msra.mxu0 0
    %127 = vmatprep.subr.bf16.mxu0 0
    %128 = vmatpush1.bf16.msra.mxu0 0
    %129 = vmatprep.subr.bf16.mxu0 0
    %130 = vmatpush1.bf16.msra.mxu0 0
    %131 = vmatprep.subr.bf16.mxu0 0
    %132 = vmatpush1.bf16.msra.mxu0 0
    %133 = vmatprep.subr.bf16.mxu0 0
    %134 = vmatpush1.bf16.msra.mxu0 0
    %135 = vmatprep.subr.bf16.mxu0 0
    %136 = vmatpush1.bf16.msra.mxu0 0
    %137 = vmatprep.subr.bf16.mxu0 0
    %138 = vmatpush1.bf16.msra.mxu0 0
    %139 = vmatprep.subr.bf16.mxu0 0
    %140 = vmatpush1.bf16.msra.mxu0 0
    %141 = vmatprep.subr.bf16.mxu0 0
    %142 = vmatpush1.bf16.msra.mxu0 0
    %143 = vmatprep.subr.bf16.mxu0 0
    %144 = vmatpush1.bf16.msra.mxu0 0
    %145 = vmatprep.subr.bf16.mxu0 0
    %146 = vmatpush1.bf16.msra.mxu0 0
    %147 = vmatprep.subr.bf16.mxu0 0
    %148 = vmatpush1.bf16.msra.mxu0 0
    %149 = vmatprep.subr.bf16.mxu0 0
    %150 = vmatpush1.bf16.msra.mxu0 0
    %151 = vmatprep.subr.bf16.mxu0 0
    %152 = vmatpush1.bf16.msra.mxu0 0
    %153 = vmatprep.mubr.bf16.mxu0 0
    %154 = vmatmul.mubr.bf16.gmra.mrb[0].mxu0 %v119
    %v155 = vpop.f32.mrb[0].mxu0
    %v156 = vadd.f32 0.0, %v155
    %v157 = vpop.f32.mrb[0].mxu0
    %v158 = vadd.f32 0.0, %v157
    %v159 = vpop.f32.mrb[0].mxu0
    %v160 = vpop.f32.mrb[0].mxu0
    %161 = vdwg.mxu0
    %162 = vmatprep.subr.bf16.mxu0 %v108
    %163 = vmatpush1.bf16.msra.mxu0 %v107
    %164 = vmatprep.subr.bf16.mxu0 0
    %165 = vmatpush1.bf16.msra.mxu0 0
    %166 = vmatprep.subr.bf16.mxu0 0
    %167 = vmatpush1.bf16.msra.mxu0 0
    %168 = vmatprep.subr.bf16.mxu0 0
    %169 = vmatpush1.bf16.msra.mxu0 0
    %170 = vmatprep.subr.bf16.mxu0 0
    %171 = vmatpush1.bf16.msra.mxu0 0
    %172 = vmatprep.subr.bf16.mxu0 0
    %173 = vmatpush1.bf16.msra.mxu0 0
    %174 = vmatprep.subr.bf16.mxu0 0
    %175 = vmatpush1.bf16.msra.mxu0 0
    %176 = vmatprep.subr.bf16.mxu0 0
    %177 = vmatpush1.bf16.msra.mxu0 0
    %178 = vmatprep.subr.bf16.mxu0 0
    %179 = vmatpush1.bf16.msra.mxu0 0
    %180 = vmatprep.subr.bf16.mxu0 0
    %181 = vmatpush1.bf16.msra.mxu0 0
    %182 = vmatprep.subr.bf16.mxu0 0
    %183 = vmatpush1.bf16.msra.mxu0 0
    %184 = vmatprep.subr.bf16.mxu0 0
    %185 = vmatpush1.bf16.msra.mxu0 0
    %186 = vmatprep.subr.bf16.mxu0 0
    %187 = vmatpush1.bf16.msra.mxu0 0
    %188 = vmatprep.subr.bf16.mxu0 0
    %189 = vmatpush1.bf16.msra.mxu0 0
    %190 = vmatprep.subr.bf16.mxu0 0
    %191 = vmatpush1.bf16.msra.mxu0 0
    %192 = vmatprep.subr.bf16.mxu0 0
    %193 = vmatpush1.bf16.msra.mxu0 0
    %194 = vmatprep.mubr.bf16.mxu0 0
    %195 = vmatmul.mubr.bf16.gmra.mrb[0].mxu0 %v119
    %v196 = vpop.f32.mrb[0].mxu0
    %v197 = vadd.f32 0.0, %v196
    %v198 = vpop.f32.mrb[0].mxu0
    %v199 = vadd.f32 0.0, %v198
    %v200 = vpop.f32.mrb[0].mxu0
    %v201 = vpop.f32.mrb[0].mxu0
    %202 = vdwg.mxu0
    %203 = vmatprep.subr.bf16.mxu0 %v110
    %204 = vmatpush1.bf16.msra.mxu0 %v109
    %205 = vmatprep.subr.bf16.mxu0 0
    %206 = vmatpush1.bf16.msra.mxu0 0
    %207 = vmatprep.subr.bf16.mxu0 0
    %208 = vmatpush1.bf16.msra.mxu0 0
    %209 = vmatprep.subr.bf16.mxu0 0
    %210 = vmatpush1.bf16.msra.mxu0 0
    %211 = vmatprep.subr.bf16.mxu0 0
    %212 = vmatpush1.bf16.msra.mxu0 0
    %213 = vmatprep.subr.bf16.mxu0 0
    %214 = vmatpush1.bf16.msra.mxu0 0
    %215 = vmatprep.subr.bf16.mxu0 0
    %216 = vmatpush1.bf16.msra.mxu0 0
    %217 = vmatprep.subr.bf16.mxu0 0
    %218 = vmatpush1.bf16.msra.mxu0 0
    %219 = vmatprep.subr.bf16.mxu0 0
    %220 = vmatpush1.bf16.msra.mxu0 0
    %221 = vmatprep.subr.bf16.mxu0 0
    %222 = vmatpush1.bf16.msra.mxu0 0
    %223 = vmatprep.subr.bf16.mxu0 0
    %224 = vmatpush1.bf16.msra.mxu0 0
    %225 = vmatprep.subr.bf16.mxu0 0
    %226 = vmatpush1.bf16.msra.mxu0 0
    %227 = vmatprep.subr.bf16.mxu0 0
    %228 = vmatpush1.bf16.msra.mxu0 0
    %229 = vmatprep.subr.bf16.mxu0 0
    %230 = vmatpush1.bf16.msra.mxu0 0
    %231 = vmatprep.subr.bf16.mxu0 0
    %232 = vmatpush1.bf16.msra.mxu0 0
    %233 = vmatprep.subr.bf16.mxu0 0
    %234 = vmatpush1.bf16.msra.mxu0 0
    %235 = vmatprep.mubr.bf16.mxu0 0
    %236 = vmatmul.mubr.bf16.gmra.mrb[0].mxu0 %v119
    %v237 = vpop.f32.mrb[0].mxu0
    %v238 = vadd.f32 0.0, %v237
    %v239 = vpop.f32.mrb[0].mxu0
    %v240 = vadd.f32 0.0, %v239
    %v241 = vpop.f32.mrb[0].mxu0
    %v242 = vpop.f32.mrb[0].mxu0
    %243 = vdwg.mxu0
    %v250 = vunpack.c.l.b16 %v44
    %v251 = vunpack.c.h.b16 %v44
    %v252 = vunpack.c.l.b16 %v45
    %v253 = vunpack.c.h.b16 %v45
    %v254 = vunpack.c.l.b16 %v46
    %v255 = vunpack.c.h.b16 %v46
    %v256 = vunpack.c.l.b16 %v47
    %v257 = vunpack.c.h.b16 %v47
    %v258 = vunpack.c.l.b16 %v48
    %v259 = vunpack.c.h.b16 %v48
    %v260 = vunpack.c.l.b16 %v49
    %v261 = vunpack.c.h.b16 %v49
    %v262 = vpack.c.b16 %v256, %v250
    %v263 = vpack.c.b16 %v257, %v251
    %v264 = vpack.c.b16 %v258, %v252
    %v265 = vpack.c.b16 %v259, %v253
    %v266 = vpack.c.b16 %v260, %v254
    %v267 = vpack.c.b16 %v261, %v255
    %v275 = vsel %vm117, %v50, 0
    %277 = vmatprep.subr.bf16.mxu0 %v263
    %278 = vmatpush1.bf16.msra.mxu0 %v262
    %279 = vmatprep.subr.bf16.mxu0 0
    %280 = vmatpush1.bf16.msra.mxu0 0
    %281 = vmatprep.subr.bf16.mxu0 0
    %282 = vmatpush1.bf16.msra.mxu0 0
    %283 = vmatprep.subr.bf16.mxu0 0
    %284 = vmatpush1.bf16.msra.mxu0 0
    %285 = vmatprep.subr.bf16.mxu0 0
    %286 = vmatpush1.bf16.msra.mxu0 0
    %287 = vmatprep.subr.bf16.mxu0 0
    %288 = vmatpush1.bf16.msra.mxu0 0
    %289 = vmatprep.subr.bf16.mxu0 0
    %290 = vmatpush1.bf16.msra.mxu0 0
    %291 = vmatprep.subr.bf16.mxu0 0
    %292 = vmatpush1.bf16.msra.mxu0 0
    %293 = vmatprep.subr.bf16.mxu0 0
    %294 = vmatpush1.bf16.msra.mxu0 0
    %295 = vmatprep.subr.bf16.mxu0 0
    %296 = vmatpush1.bf16.msra.mxu0 0
    %297 = vmatprep.subr.bf16.mxu0 0
    %298 = vmatpush1.bf16.msra.mxu0 0
    %299 = vmatprep.subr.bf16.mxu0 0
    %300 = vmatpush1.bf16.msra.mxu0 0
    %301 = vmatprep.subr.bf16.mxu0 0
    %302 = vmatpush1.bf16.msra.mxu0 0
    %303 = vmatprep.subr.bf16.mxu0 0
    %304 = vmatpush1.bf16.msra.mxu0 0
    %305 = vmatprep.subr.bf16.mxu0 0
    %306 = vmatpush1.bf16.msra.mxu0 0
    %307 = vmatprep.subr.bf16.mxu0 0
    %308 = vmatpush1.bf16.msra.mxu0 0
    %309 = vmatprep.mubr.bf16.mxu0 0
    %310 = vmatmul.mubr.bf16.gmra.mrb[0].mxu0 %v275
    %v311 = vpop.f32.mrb[0].mxu0
    %v312 = vadd.f32 %v156, %v311
    %v313 = vpop.f32.mrb[0].mxu0
    %v314 = vadd.f32 %v158, %v313
    %v315 = vpop.f32.mrb[0].mxu0
    %v316 = vpop.f32.mrb[0].mxu0
    %317 = vdwg.mxu0
    %318 = vmatprep.subr.bf16.mxu0 %v265
    %319 = vmatpush1.bf16.msra.mxu0 %v264
    %320 = vmatprep.subr.bf16.mxu0 0
    %321 = vmatpush1.bf16.msra.mxu0 0
    %322 = vmatprep.subr.bf16.mxu0 0
    %323 = vmatpush1.bf16.msra.mxu0 0
    %324 = vmatprep.subr.bf16.mxu0 0
    %325 = vmatpush1.bf16.msra.mxu0 0
    %326 = vmatprep.subr.bf16.mxu0 0
    %327 = vmatpush1.bf16.msra.mxu0 0
    %328 = vmatprep.subr.bf16.mxu0 0
    %329 = vmatpush1.bf16.msra.mxu0 0
    %330 = vmatprep.subr.bf16.mxu0 0
    %331 = vmatpush1.bf16.msra.mxu0 0
    %332 = vmatprep.subr.bf16.mxu0 0
    %333 = vmatpush1.bf16.msra.mxu0 0
    %334 = vmatprep.subr.bf16.mxu0 0
    %335 = vmatpush1.bf16.msra.mxu0 0
    %336 = vmatprep.subr.bf16.mxu0 0
    %337 = vmatpush1.bf16.msra.mxu0 0
    %338 = vmatprep.subr.bf16.mxu0 0
    %339 = vmatpush1.bf16.msra.mxu0 0
    %340 = vmatprep.subr.bf16.mxu0 0
    %341 = vmatpush1.bf16.msra.mxu0 0
    %342 = vmatprep.subr.bf16.mxu0 0
    %343 = vmatpush1.bf16.msra.mxu0 0
    %344 = vmatprep.subr.bf16.mxu0 0
    %345 = vmatpush1.bf16.msra.mxu0 0
    %346 = vmatprep.subr.bf16.mxu0 0
    %347 = vmatpush1.bf16.msra.mxu0 0
    %348 = vmatprep.subr.bf16.mxu0 0
    %349 = vmatpush1.bf16.msra.mxu0 0
    %350 = vmatprep.mubr.bf16.mxu0 0
    %351 = vmatmul.mubr.bf16.gmra.mrb[0].mxu0 %v275
    %v352 = vpop.f32.mrb[0].mxu0
    %v353 = vadd.f32 %v197, %v352
    %v354 = vpop.f32.mrb[0].mxu0
    %v355 = vadd.f32 %v199, %v354
    %v356 = vpop.f32.mrb[0].mxu0
    %v357 = vpop.f32.mrb[0].mxu0
    %358 = vdwg.mxu0
    %359 = vmatprep.subr.bf16.mxu0 %v267
    %360 = vmatpush1.bf16.msra.mxu0 %v266
    %361 = vmatprep.subr.bf16.mxu0 0
    %362 = vmatpush1.bf16.msra.mxu0 0
    %363 = vmatprep.subr.bf16.mxu0 0
    %364 = vmatpush1.bf16.msra.mxu0 0
    %365 = vmatprep.subr.bf16.mxu0 0
    %366 = vmatpush1.bf16.msra.mxu0 0
    %367 = vmatprep.subr.bf16.mxu0 0
    %368 = vmatpush1.bf16.msra.mxu0 0
    %369 = vmatprep.subr.bf16.mxu0 0
    %370 = vmatpush1.bf16.msra.mxu0 0
    %371 = vmatprep.subr.bf16.mxu0 0
    %372 = vmatpush1.bf16.msra.mxu0 0
    %373 = vmatprep.subr.bf16.mxu0 0
    %374 = vmatpush1.bf16.msra.mxu0 0
    %375 = vmatprep.subr.bf16.mxu0 0
    %376 = vmatpush1.bf16.msra.mxu0 0
    %377 = vmatprep.subr.bf16.mxu0 0
    %378 = vmatpush1.bf16.msra.mxu0 0
    %379 = vmatprep.subr.bf16.mxu0 0
    %380 = vmatpush1.bf16.msra.mxu0 0
    %381 = vmatprep.subr.bf16.mxu0 0
    %382 = vmatpush1.bf16.msra.mxu0 0
    %383 = vmatprep.subr.bf16.mxu0 0
    %384 = vmatpush1.bf16.msra.mxu0 0
    %385 = vmatprep.subr.bf16.mxu0 0
    %386 = vmatpush1.bf16.msra.mxu0 0
    %387 = vmatprep.subr.bf16.mxu0 0
    %388 = vmatpush1.bf16.msra.mxu0 0
    %389 = vmatprep.subr.bf16.mxu0 0
    %390 = vmatpush1.bf16.msra.mxu0 0
    %391 = vmatprep.mubr.bf16.mxu0 0
    %392 = vmatmul.mubr.bf16.gmra.mrb[0].mxu0 %v275
    %v393 = vpop.f32.mrb[0].mxu0
    %v394 = vadd.f32 %v238, %v393
    %v395 = vpop.f32.mrb[0].mxu0
    %v396 = vadd.f32 %v240, %v395
    %v397 = vpop.f32.mrb[0].mxu0
    %v398 = vpop.f32.mrb[0].mxu0
    %399 = vdwg.mxu0
    %s400 = scalar_lea.vmem [#allocation5], 8
    %v401 = vld [vmem:[%s400] sm:$0xf]
    %402 = vrot.lane.b32.xlu0 %v83, 126
    %v403 = vpop.permute.xlu0 %402
    %404 = vrot.lane.b32.xlu0 %v84, 126
    %v405 = vpop.permute.xlu0 %404
    %406 = vrot.lane.b32.xlu0 %v85, 126
    %v407 = vpop.permute.xlu0 %406
    %408 = vrot.lane.b32.xlu0 %v86, 126
    %v409 = vpop.permute.xlu0 %408
    %410 = vrot.lane.b32.xlu0 %v87, 126
    %v411 = vpop.permute.xlu0 %410
    %412 = vrot.lane.b32.xlu0 %v88, 126
    %v413 = vpop.permute.xlu0 %412
    %414 = vrot.lane.b32.xlu0 %v89, 126
    %v415 = vpop.permute.xlu0 %414
    %vm416 = vcmask 1031168
    %v417 = vsel %vm416, %v403, %v405
    %v418 = vsel %vm416, %v405, %v407
    %v419 = vsel %vm416, %v407, %v409
    %v420 = vsel %vm416, %v409, %v411
    %v421 = vsel %vm416, %v411, %v413
    %v422 = vsel %vm416, %v413, %v415
    %v430 = vsel %vm117, %v401, 0
    %432 = vmatprep.subr.bf16.mxu0 %v418
    %433 = vmatpush1.bf16.msra.mxu0 %v417
    %434 = vmatprep.subr.bf16.mxu0 0
    %435 = vmatpush1.bf16.msra.mxu0 0
    %436 = vmatprep.subr.bf16.mxu0 0
    %437 = vmatpush1.bf16.msra.mxu0 0
    %438 = vmatprep.subr.bf16.mxu0 0
    %439 = vmatpush1.bf16.msra.mxu0 0
    %440 = vmatprep.subr.bf16.mxu0 0
    %441 = vmatpush1.bf16.msra.mxu0 0
    %442 = vmatprep.subr.bf16.mxu0 0
    %443 = vmatpush1.bf16.msra.mxu0 0
    %444 = vmatprep.subr.bf16.mxu0 0
    %445 = vmatpush1.bf16.msra.mxu0 0
    %446 = vmatprep.subr.bf16.mxu0 0
    %447 = vmatpush1.bf16.msra.mxu0 0
    %448 = vmatprep.subr.bf16.mxu0 0
    %449 = vmatpush1.bf16.msra.mxu0 0
    %450 = vmatprep.subr.bf16.mxu0 0
    %451 = vmatpush1.bf16.msra.mxu0 0
    %452 = vmatprep.subr.bf16.mxu0 0
    %453 = vmatpush1.bf16.msra.mxu0 0
    %454 = vmatprep.subr.bf16.mxu0 0
    %455 = vmatpush1.bf16.msra.mxu0 0
    %456 = vmatprep.subr.bf16.mxu0 0
    %457 = vmatpush1.bf16.msra.mxu0 0
    %458 = vmatprep.subr.bf16.mxu0 0
    %459 = vmatpush1.bf16.msra.mxu0 0
    %460 = vmatprep.subr.bf16.mxu0 0
    %461 = vmatpush1.bf16.msra.mxu0 0
    %462 = vmatprep.subr.bf16.mxu0 0
    %463 = vmatpush1.bf16.msra.mxu0 0
    %464 = vmatprep.mubr.bf16.mxu0 0
    %465 = vmatmul.mubr.bf16.gmra.mrb[0].mxu0 %v430
    %v466 = vpop.f32.mrb[0].mxu0
    %v467 = vadd.f32 0.0, %v466
    %v468 = vpop.f32.mrb[0].mxu0
    %v469 = vadd.f32 0.0, %v468
    %v470 = vpop.f32.mrb[0].mxu0
    %v471 = vpop.f32.mrb[0].mxu0
    %472 = vdwg.mxu0
    %473 = vmatprep.subr.bf16.mxu0 %v420
    %474 = vmatpush1.bf16.msra.mxu0 %v419
    %475 = vmatprep.subr.bf16.mxu0 0
    %476 = vmatpush1.bf16.msra.mxu0 0
    %477 = vmatprep.subr.bf16.mxu0 0
    %478 = vmatpush1.bf16.msra.mxu0 0
    %479 = vmatprep.subr.bf16.mxu0 0
    %480 = vmatpush1.bf16.msra.mxu0 0
    %481 = vmatprep.subr.bf16.mxu0 0
    %482 = vmatpush1.bf16.msra.mxu0 0
    %483 = vmatprep.subr.bf16.mxu0 0
    %484 = vmatpush1.bf16.msra.mxu0 0
    %485 = vmatprep.subr.bf16.mxu0 0
    %486 = vmatpush1.bf16.msra.mxu0 0
    %487 = vmatprep.subr.bf16.mxu0 0
    %488 = vmatpush1.bf16.msra.mxu0 0
    %489 = vmatprep.subr.bf16.mxu0 0
    %490 = vmatpush1.bf16.msra.mxu0 0
    %491 = vmatprep.subr.bf16.mxu0 0
    %492 = vmatpush1.bf16.msra.mxu0 0
    %493 = vmatprep.subr.bf16.mxu0 0
    %494 = vmatpush1.bf16.msra.mxu0 0
    %495 = vmatprep.subr.bf16.mxu0 0
    %496 = vmatpush1.bf16.msra.mxu0 0
    %497 = vmatprep.subr.bf16.mxu0 0
    %498 = vmatpush1.bf16.msra.mxu0 0
    %499 = vmatprep.subr.bf16.mxu0 0
    %500 = vmatpush1.bf16.msra.mxu0 0
    %501 = vmatprep.subr.bf16.mxu0 0
    %502 = vmatpush1.bf16.msra.mxu0 0
    %503 = vmatprep.subr.bf16.mxu0 0
    %504 = vmatpush1.bf16.msra.mxu0 0
    %505 = vmatprep.mubr.bf16.mxu0 0
    %506 = vmatmul.mubr.bf16.gmra.mrb[0].mxu0 %v430
    %v507 = vpop.f32.mrb[0].mxu0
    %v508 = vadd.f32 0.0, %v507
    %v509 = vpop.f32.mrb[0].mxu0
    %v510 = vadd.f32 0.0, %v509
    %v511 = vpop.f32.mrb[0].mxu0
    %v512 = vpop.f32.mrb[0].mxu0
    %513 = vdwg.mxu0
    %514 = vmatprep.subr.bf16.mxu0 %v422
    %515 = vmatpush1.bf16.msra.mxu0 %v421
    %516 = vmatprep.subr.bf16.mxu0 0
    %517 = vmatpush1.bf16.msra.mxu0 0
    %518 = vmatprep.subr.bf16.mxu0 0
    %519 = vmatpush1.bf16.msra.mxu0 0
    %520 = vmatprep.subr.bf16.mxu0 0
    %521 = vmatpush1.bf16.msra.mxu0 0
    %522 = vmatprep.subr.bf16.mxu0 0
    %523 = vmatpush1.bf16.msra.mxu0 0
    %524 = vmatprep.subr.bf16.mxu0 0
    %525 = vmatpush1.bf16.msra.mxu0 0
    %526 = vmatprep.subr.bf16.mxu0 0
    %527 = vmatpush1.bf16.msra.mxu0 0
    %528 = vmatprep.subr.bf16.mxu0 0
    %529 = vmatpush1.bf16.msra.mxu0 0
    %530 = vmatprep.subr.bf16.mxu0 0
    %531 = vmatpush1.bf16.msra.mxu0 0
    %532 = vmatprep.subr.bf16.mxu0 0
    %533 = vmatpush1.bf16.msra.mxu0 0
    %534 = vmatprep.subr.bf16.mxu0 0
    %535 = vmatpush1.bf16.msra.mxu0 0
    %536 = vmatprep.subr.bf16.mxu0 0
    %537 = vmatpush1.bf16.msra.mxu0 0
    %538 = vmatprep.subr.bf16.mxu0 0
    %539 = vmatpush1.bf16.msra.mxu0 0
    %540 = vmatprep.subr.bf16.mxu0 0
    %541 = vmatpush1.bf16.msra.mxu0 0
    %542 = vmatprep.subr.bf16.mxu0 0
    %543 = vmatpush1.bf16.msra.mxu0 0
    %544 = vmatprep.subr.bf16.mxu0 0
    %545 = vmatpush1.bf16.msra.mxu0 0
    %546 = vmatprep.mubr.bf16.mxu0 0
    %547 = vmatmul.mubr.bf16.gmra.mrb[0].mxu0 %v430
    %v548 = vpop.f32.mrb[0].mxu0
    %v549 = vadd.f32 0.0, %v548
    %v550 = vpop.f32.mrb[0].mxu0
    %v551 = vadd.f32 0.0, %v550
    %v552 = vpop.f32.mrb[0].mxu0
    %v553 = vpop.f32.mrb[0].mxu0
    %554 = vdwg.mxu0
    %v555 = vadd.f32 %v312, %v467
    %v556 = vadd.f32 %v314, %v469
    %v557 = vadd.f32 %v353, %v508
    %v558 = vadd.f32 %v355, %v510
    %v559 = vadd.f32 %v394, %v549
    %v560 = vadd.f32 %v396, %v551
    %s561 = scalar_lea.vmem [#allocation5], 12
    %v562 = vld [vmem:[%s561] sm:$0xf]
    %563 = vrot.lane.b32.xlu0 %v83, 110
    %v564 = vpop.permute.xlu0 %563
    %565 = vrot.lane.b32.xlu0 %v84, 110
    %v566 = vpop.permute.xlu0 %565
    %567 = vrot.lane.b32.xlu0 %v85, 110
    %v568 = vpop.permute.xlu0 %567
    %569 = vrot.lane.b32.xlu0 %v86, 110
    %v570 = vpop.permute.xlu0 %569
    %571 = vrot.lane.b32.xlu0 %v87, 110
    %v572 = vpop.permute.xlu0 %571
    %573 = vrot.lane.b32.xlu0 %v88, 110
    %v574 = vpop.permute.xlu0 %573
    %575 = vrot.lane.b32.xlu0 %v89, 110
    %v576 = vpop.permute.xlu0 %575
    %vm577 = vcmask 900096
    %v578 = vsel %vm577, %v564, %v566
    %v579 = vsel %vm577, %v566, %v568
    %v580 = vsel %vm577, %v568, %v570
    %v581 = vsel %vm577, %v570, %v572
    %v582 = vsel %vm577, %v572, %v574
    %v583 = vsel %vm577, %v574, %v576
    %v591 = vsel %vm117, %v562, 0
    %593 = vmatprep.subr.bf16.mxu0 %v579
    %594 = vmatpush1.bf16.msra.mxu0 %v578
    %595 = vmatprep.subr.bf16.mxu0 0
    %596 = vmatpush1.bf16.msra.mxu0 0
    %597 = vmatprep.subr.bf16.mxu0 0
    %598 = vmatpush1.bf16.msra.mxu0 0
    %599 = vmatprep.subr.bf16.mxu0 0
    %600 = vmatpush1.bf16.msra.mxu0 0
    %601 = vmatprep.subr.bf16.mxu0 0
    %602 = vmatpush1.bf16.msra.mxu0 0
    %603 = vmatprep.subr.bf16.mxu0 0
    %604 = vmatpush1.bf16.msra.mxu0 0
    %605 = vmatprep.subr.bf16.mxu0 0
    %606 = vmatpush1.bf16.msra.mxu0 0
    %607 = vmatprep.subr.bf16.mxu0 0
    %608 = vmatpush1.bf16.msra.mxu0 0
    %609 = vmatprep.subr.bf16.mxu0 0
    %610 = vmatpush1.bf16.msra.mxu0 0
    %611 = vmatprep.subr.bf16.mxu0 0
    %612 = vmatpush1.bf16.msra.mxu0 0
    %613 = vmatprep.subr.bf16.mxu0 0
    %614 = vmatpush1.bf16.msra.mxu0 0
    %615 = vmatprep.subr.bf16.mxu0 0
    %616 = vmatpush1.bf16.msra.mxu0 0
    %617 = vmatprep.subr.bf16.mxu0 0
    %618 = vmatpush1.bf16.msra.mxu0 0
    %619 = vmatprep.subr.bf16.mxu0 0
    %620 = vmatpush1.bf16.msra.mxu0 0
    %621 = vmatprep.subr.bf16.mxu0 0
    %622 = vmatpush1.bf16.msra.mxu0 0
    %623 = vmatprep.subr.bf16.mxu0 0
    %624 = vmatpush1.bf16.msra.mxu0 0
    %625 = vmatprep.mubr.bf16.mxu0 0
    %626 = vmatmul.mubr.bf16.gmra.mrb[0].mxu0 %v591
    %v627 = vpop.f32.mrb[0].mxu0
    %v628 = vadd.f32 0.0, %v627
    %v629 = vpop.f32.mrb[0].mxu0
    %v630 = vadd.f32 0.0, %v629
    %v631 = vpop.f32.mrb[0].mxu0
    %v632 = vpop.f32.mrb[0].mxu0
    %633 = vdwg.mxu0
    %634 = vmatprep.subr.bf16.mxu0 %v581
    %635 = vmatpush1.bf16.msra.mxu0 %v580
    %636 = vmatprep.subr.bf16.mxu0 0
    %637 = vmatpush1.bf16.msra.mxu0 0
    %638 = vmatprep.subr.bf16.mxu0 0
    %639 = vmatpush1.bf16.msra.mxu0 0
    %640 = vmatprep.subr.bf16.mxu0 0
    %641 = vmatpush1.bf16.msra.mxu0 0
    %642 = vmatprep.subr.bf16.mxu0 0
    %643 = vmatpush1.bf16.msra.mxu0 0
    %644 = vmatprep.subr.bf16.mxu0 0
    %645 = vmatpush1.bf16.msra.mxu0 0
    %646 = vmatprep.subr.bf16.mxu0 0
    %647 = vmatpush1.bf16.msra.mxu0 0
    %648 = vmatprep.subr.bf16.mxu0 0
    %649 = vmatpush1.bf16.msra.mxu0 0
    %650 = vmatprep.subr.bf16.mxu0 0
    %651 = vmatpush1.bf16.msra.mxu0 0
    %652 = vmatprep.subr.bf16.mxu0 0
    %653 = vmatpush1.bf16.msra.mxu0 0
    %654 = vmatprep.subr.bf16.mxu0 0
    %655 = vmatpush1.bf16.msra.mxu0 0
    %656 = vmatprep.subr.bf16.mxu0 0
    %657 = vmatpush1.bf16.msra.mxu0 0
    %658 = vmatprep.subr.bf16.mxu0 0
    %659 = vmatpush1.bf16.msra.mxu0 0
    %660 = vmatprep.subr.bf16.mxu0 0
    %661 = vmatpush1.bf16.msra.mxu0 0
    %662 = vmatprep.subr.bf16.mxu0 0
    %663 = vmatpush1.bf16.msra.mxu0 0
    %664 = vmatprep.subr.bf16.mxu0 0
    %665 = vmatpush1.bf16.msra.mxu0 0
    %666 = vmatprep.mubr.bf16.mxu0 0
    %667 = vmatmul.mubr.bf16.gmra.mrb[0].mxu0 %v591
    %v668 = vpop.f32.mrb[0].mxu0
    %v669 = vadd.f32 0.0, %v668
    %v670 = vpop.f32.mrb[0].mxu0
    %v671 = vadd.f32 0.0, %v670
    %v672 = vpop.f32.mrb[0].mxu0
    %v673 = vpop.f32.mrb[0].mxu0
    %674 = vdwg.mxu0
    %675 = vmatprep.subr.bf16.mxu0 %v583
    %676 = vmatpush1.bf16.msra.mxu0 %v582
    %677 = vmatprep.subr.bf16.mxu0 0
    %678 = vmatpush1.bf16.msra.mxu0 0
    %679 = vmatprep.subr.bf16.mxu0 0
    %680 = vmatpush1.bf16.msra.mxu0 0
    %681 = vmatprep.subr.bf16.mxu0 0
    %682 = vmatpush1.bf16.msra.mxu0 0
    %683 = vmatprep.subr.bf16.mxu0 0
    %684 = vmatpush1.bf16.msra.mxu0 0
    %685 = vmatprep.subr.bf16.mxu0 0
    %686 = vmatpush1.bf16.msra.mxu0 0
    %687 = vmatprep.subr.bf16.mxu0 0
    %688 = vmatpush1.bf16.msra.mxu0 0
    %689 = vmatprep.subr.bf16.mxu0 0
    %690 = vmatpush1.bf16.msra.mxu0 0
    %691 = vmatprep.subr.bf16.mxu0 0
    %692 = vmatpush1.bf16.msra.mxu0 0
    %693 = vmatprep.subr.bf16.mxu0 0
    %694 = vmatpush1.bf16.msra.mxu0 0
    %695 = vmatprep.subr.bf16.mxu0 0
    %696 = vmatpush1.bf16.msra.mxu0 0
    %697 = vmatprep.subr.bf16.mxu0 0
    %698 = vmatpush1.bf16.msra.mxu0 0
    %699 = vmatprep.subr.bf16.mxu0 0
    %700 = vmatpush1.bf16.msra.mxu0 0
    %701 = vmatprep.subr.bf16.mxu0 0
    %702 = vmatpush1.bf16.msra.mxu0 0
    %703 = vmatprep.subr.bf16.mxu0 0
    %704 = vmatpush1.bf16.msra.mxu0 0
    %705 = vmatprep.subr.bf16.mxu0 0
    %706 = vmatpush1.bf16.msra.mxu0 0
    %707 = vmatprep.mubr.bf16.mxu0 0
    %708 = vmatmul.mubr.bf16.gmra.mrb[0].mxu0 %v591
    %v709 = vpop.f32.mrb[0].mxu0
    %v710 = vadd.f32 0.0, %v709
    %v711 = vpop.f32.mrb[0].mxu0
    %v712 = vadd.f32 0.0, %v711
    %v713 = vpop.f32.mrb[0].mxu0
    %v714 = vpop.f32.mrb[0].mxu0
    %715 = vdwg.mxu0
    %v716 = vadd.f32 %v555, %v628
    %v717 = vadd.f32 %v556, %v630
    %v718 = vadd.f32 %v557, %v669
    %v719 = vadd.f32 %v558, %v671
    %v720 = vadd.f32 %v559, %v710
    %v721 = vadd.f32 %v560, %v712
    %s722 = scalar_lea.vmem [#allocation5], 16
    %v723 = vld [vmem:[%s722] sm:$0xf]
    %724 = vrot.lane.b32.xlu0 %v83, 109
    %v725 = vpop.permute.xlu0 %724
    %726 = vrot.lane.b32.xlu0 %v84, 109
    %v727 = vpop.permute.xlu0 %726
    %728 = vrot.lane.b32.xlu0 %v85, 109
    %v729 = vpop.permute.xlu0 %728
    %730 = vrot.lane.b32.xlu0 %v86, 109
    %v731 = vpop.permute.xlu0 %730
    %732 = vrot.lane.b32.xlu0 %v87, 109
    %v733 = vpop.permute.xlu0 %732
    %734 = vrot.lane.b32.xlu0 %v88, 109
    %v735 = vpop.permute.xlu0 %734
    %736 = vrot.lane.b32.xlu0 %v89, 109
    %v737 = vpop.permute.xlu0 %736
    %vm738 = vcmask 891904
    %v739 = vsel %vm738, %v725, %v727
    %v740 = vsel %vm738, %v727, %v729
    %v741 = vsel %vm738, %v729, %v731
    %v742 = vsel %vm738, %v731, %v733
    %v743 = vsel %vm738, %v733, %v735
    %v744 = vsel %vm738, %v735, %v737
    %v752 = vsel %vm117, %v723, 0
    %754 = vmatprep.subr.bf16.mxu0 %v740
    %755 = vmatpush1.bf16.msra.mxu0 %v739
    %756 = vmatprep.subr.bf16.mxu0 0
    %757 = vmatpush1.bf16.msra.mxu0 0
    %758 = vmatprep.subr.bf16.mxu0 0
    %759 = vmatpush1.bf16.msra.mxu0 0
    %760 = vmatprep.subr.bf16.mxu0 0
    %761 = vmatpush1.bf16.msra.mxu0 0
    %762 = vmatprep.subr.bf16.mxu0 0
    %763 = vmatpush1.bf16.msra.mxu0 0
    %764 = vmatprep.subr.bf16.mxu0 0
    %765 = vmatpush1.bf16.msra.mxu0 0
    %766 = vmatprep.subr.bf16.mxu0 0
    %767 = vmatpush1.bf16.msra.mxu0 0
    %768 = vmatprep.subr.bf16.mxu0 0
    %769 = vmatpush1.bf16.msra.mxu0 0
    %770 = vmatprep.subr.bf16.mxu0 0
    %771 = vmatpush1.bf16.msra.mxu0 0
    %772 = vmatprep.subr.bf16.mxu0 0
    %773 = vmatpush1.bf16.msra.mxu0 0
    %774 = vmatprep.subr.bf16.mxu0 0
    %775 = vmatpush1.bf16.msra.mxu0 0
    %776 = vmatprep.subr.bf16.mxu0 0
    %777 = vmatpush1.bf16.msra.mxu0 0
    %778 = vmatprep.subr.bf16.mxu0 0
    %779 = vmatpush1.bf16.msra.mxu0 0
    %780 = vmatprep.subr.bf16.mxu0 0
    %781 = vmatpush1.bf16.msra.mxu0 0
    %782 = vmatprep.subr.bf16.mxu0 0
    %783 = vmatpush1.bf16.msra.mxu0 0
    %784 = vmatprep.subr.bf16.mxu0 0
    %785 = vmatpush1.bf16.msra.mxu0 0
    %786 = vmatprep.mubr.bf16.mxu0 0
    %787 = vmatmul.mubr.bf16.gmra.mrb[0].mxu0 %v752
    %v788 = vpop.f32.mrb[0].mxu0
    %v789 = vadd.f32 0.0, %v788
    %v790 = vpop.f32.mrb[0].mxu0
    %v791 = vadd.f32 0.0, %v790
    %v792 = vpop.f32.mrb[0].mxu0
    %v793 = vpop.f32.mrb[0].mxu0
    %794 = vdwg.mxu0
    %795 = vmatprep.subr.bf16.mxu0 %v742
    %796 = vmatpush1.bf16.msra.mxu0 %v741
    %797 = vmatprep.subr.bf16.mxu0 0
    %798 = vmatpush1.bf16.msra.mxu0 0
    %799 = vmatprep.subr.bf16.mxu0 0
    %800 = vmatpush1.bf16.msra.mxu0 0
    %801 = vmatprep.subr.bf16.mxu0 0
    %802 = vmatpush1.bf16.msra.mxu0 0
    %803 = vmatprep.subr.bf16.mxu0 0
    %804 = vmatpush1.bf16.msra.mxu0 0
    %805 = vmatprep.subr.bf16.mxu0 0
    %806 = vmatpush1.bf16.msra.mxu0 0
    %807 = vmatprep.subr.bf16.mxu0 0
    %808 = vmatpush1.bf16.msra.mxu0 0
    %809 = vmatprep.subr.bf16.mxu0 0
    %810 = vmatpush1.bf16.msra.mxu0 0
    %811 = vmatprep.subr.bf16.mxu0 0
    %812 = vmatpush1.bf16.msra.mxu0 0
    %813 = vmatprep.subr.bf16.mxu0 0
    %814 = vmatpush1.bf16.msra.mxu0 0
    %815 = vmatprep.subr.bf16.mxu0 0
    %816 = vmatpush1.bf16.msra.mxu0 0
    %817 = vmatprep.subr.bf16.mxu0 0
    %818 = vmatpush1.bf16.msra.mxu0 0
    %819 = vmatprep.subr.bf16.mxu0 0
    %820 = vmatpush1.bf16.msra.mxu0 0
    %821 = vmatprep.subr.bf16.mxu0 0
    %822 = vmatpush1.bf16.msra.mxu0 0
    %823 = vmatprep.subr.bf16.mxu0 0
    %824 = vmatpush1.bf16.msra.mxu0 0
    %825 = vmatprep.subr.bf16.mxu0 0
    %826 = vmatpush1.bf16.msra.mxu0 0
    %827 = vmatprep.mubr.bf16.mxu0 0
    %828 = vmatmul.mubr.bf16.gmra.mrb[0].mxu0 %v752
    %v829 = vpop.f32.mrb[0].mxu0
    %v830 = vadd.f32 0.0, %v829
    %v831 = vpop.f32.mrb[0].mxu0
    %v832 = vadd.f32 0.0, %v831
    %v833 = vpop.f32.mrb[0].mxu0
    %v834 = vpop.f32.mrb[0].mxu0
    %835 = vdwg.mxu0
    %836 = vmatprep.subr.bf16.mxu0 %v744
    %837 = vmatpush1.bf16.msra.mxu0 %v743
    %838 = vmatprep.subr.bf16.mxu0 0
    %839 = vmatpush1.bf16.msra.mxu0 0
    %840 = vmatprep.subr.bf16.mxu0 0
    %841 = vmatpush1.bf16.msra.mxu0 0
    %842 = vmatprep.subr.bf16.mxu0 0
    %843 = vmatpush1.bf16.msra.mxu0 0
    %844 = vmatprep.subr.bf16.mxu0 0
    %845 = vmatpush1.bf16.msra.mxu0 0
    %846 = vmatprep.subr.bf16.mxu0 0
    %847 = vmatpush1.bf16.msra.mxu0 0
    %848 = vmatprep.subr.bf16.mxu0 0
    %849 = vmatpush1.bf16.msra.mxu0 0
    %850 = vmatprep.subr.bf16.mxu0 0
    %851 = vmatpush1.bf16.msra.mxu0 0
    %852 = vmatprep.subr.bf16.mxu0 0
    %853 = vmatpush1.bf16.msra.mxu0 0
    %854 = vmatprep.subr.bf16.mxu0 0
    %855 = vmatpush1.bf16.msra.mxu0 0
    %856 = vmatprep.subr.bf16.mxu0 0
    %857 = vmatpush1.bf16.msra.mxu0 0
    %858 = vmatprep.subr.bf16.mxu0 0
    %859 = vmatpush1.bf16.msra.mxu0 0
    %860 = vmatprep.subr.bf16.mxu0 0
    %861 = vmatpush1.bf16.msra.mxu0 0
    %862 = vmatprep.subr.bf16.mxu0 0
    %863 = vmatpush1.bf16.msra.mxu0 0
    %864 = vmatprep.subr.bf16.mxu0 0
    %865 = vmatpush1.bf16.msra.mxu0 0
    %866 = vmatprep.subr.bf16.mxu0 0
    %867 = vmatpush1.bf16.msra.mxu0 0
    %868 = vmatprep.mubr.bf16.mxu0 0
    %869 = vmatmul.mubr.bf16.gmra.mrb[0].mxu0 %v752
    %v870 = vpop.f32.mrb[0].mxu0
    %v871 = vadd.f32 0.0, %v870
    %v872 = vpop.f32.mrb[0].mxu0
    %v873 = vadd.f32 0.0, %v872
    %v874 = vpop.f32.mrb[0].mxu0
    %v875 = vpop.f32.mrb[0].mxu0
    %876 = vdwg.mxu0
    %v877 = vadd.f32 %v716, %v789
    %v878 = vadd.f32 %v717, %v791
    %v879 = vadd.f32 %v718, %v830
    %v880 = vadd.f32 %v719, %v832
    %v881 = vadd.f32 %v720, %v871
    %v882 = vadd.f32 %v721, %v873
    %s883 = scalar_lea.vmem [#allocation5], 20
    %v884 = vld [vmem:[%s883] sm:$0xf]
    %885 = vrot.lane.b32.xlu0 %v83, 108
    %v886 = vpop.permute.xlu0 %885
    %887 = vrot.lane.b32.xlu0 %v84, 108
    %v888 = vpop.permute.xlu0 %887
    %889 = vrot.lane.b32.xlu0 %v85, 108
    %v890 = vpop.permute.xlu0 %889
    %891 = vrot.lane.b32.xlu0 %v86, 108
    %v892 = vpop.permute.xlu0 %891
    %893 = vrot.lane.b32.xlu0 %v87, 108
    %v894 = vpop.permute.xlu0 %893
    %895 = vrot.lane.b32.xlu0 %v88, 108
    %v896 = vpop.permute.xlu0 %895
    %897 = vrot.lane.b32.xlu0 %v89, 108
    %v898 = vpop.permute.xlu0 %897
    %vm899 = vcmask 883712
    %v900 = vsel %vm899, %v886, %v888
    %v901 = vsel %vm899, %v888, %v890
    %v902 = vsel %vm899, %v890, %v892
    %v903 = vsel %vm899, %v892, %v894
    %v904 = vsel %vm899, %v894, %v896
    %v905 = vsel %vm899, %v896, %v898
    %v913 = vsel %vm117, %v884, 0
    %915 = vmatprep.subr.bf16.mxu0 %v901
    %916 = vmatpush1.bf16.msra.mxu0 %v900
    %917 = vmatprep.subr.bf16.mxu0 0
    %918 = vmatpush1.bf16.msra.mxu0 0
    %919 = vmatprep.subr.bf16.mxu0 0
    %920 = vmatpush1.bf16.msra.mxu0 0
    %921 = vmatprep.subr.bf16.mxu0 0
    %922 = vmatpush1.bf16.msra.mxu0 0
    %923 = vmatprep.subr.bf16.mxu0 0
    %924 = vmatpush1.bf16.msra.mxu0 0
    %925 = vmatprep.subr.bf16.mxu0 0
    %926 = vmatpush1.bf16.msra.mxu0 0
    %927 = vmatprep.subr.bf16.mxu0 0
    %928 = vmatpush1.bf16.msra.mxu0 0
    %929 = vmatprep.subr.bf16.mxu0 0
    %930 = vmatpush1.bf16.msra.mxu0 0
    %931 = vmatprep.subr.bf16.mxu0 0
    %932 = vmatpush1.bf16.msra.mxu0 0
    %933 = vmatprep.subr.bf16.mxu0 0
    %934 = vmatpush1.bf16.msra.mxu0 0
    %935 = vmatprep.subr.bf16.mxu0 0
    %936 = vmatpush1.bf16.msra.mxu0 0
    %937 = vmatprep.subr.bf16.mxu0 0
    %938 = vmatpush1.bf16.msra.mxu0 0
    %939 = vmatprep.subr.bf16.mxu0 0
    %940 = vmatpush1.bf16.msra.mxu0 0
    %941 = vmatprep.subr.bf16.mxu0 0
    %942 = vmatpush1.bf16.msra.mxu0 0
    %943 = vmatprep.subr.bf16.mxu0 0
    %944 = vmatpush1.bf16.msra.mxu0 0
    %945 = vmatprep.subr.bf16.mxu0 0
    %946 = vmatpush1.bf16.msra.mxu0 0
    %947 = vmatprep.mubr.bf16.mxu0 0
    %948 = vmatmul.mubr.bf16.gmra.mrb[0].mxu0 %v913
    %v949 = vpop.f32.mrb[0].mxu0
    %v950 = vadd.f32 0.0, %v949
    %v951 = vpop.f32.mrb[0].mxu0
    %v952 = vadd.f32 0.0, %v951
    %v953 = vpop.f32.mrb[0].mxu0
    %v954 = vpop.f32.mrb[0].mxu0
    %955 = vdwg.mxu0
    %956 = vmatprep.subr.bf16.mxu0 %v903
    %957 = vmatpush1.bf16.msra.mxu0 %v902
    %958 = vmatprep.subr.bf16.mxu0 0
    %959 = vmatpush1.bf16.msra.mxu0 0
    %960 = vmatprep.subr.bf16.mxu0 0
    %961 = vmatpush1.bf16.msra.mxu0 0
    %962 = vmatprep.subr.bf16.mxu0 0
    %963 = vmatpush1.bf16.msra.mxu0 0
    %964 = vmatprep.subr.bf16.mxu0 0
    %965 = vmatpush1.bf16.msra.mxu0 0
    %966 = vmatprep.subr.bf16.mxu0 0
    %967 = vmatpush1.bf16.msra.mxu0 0
    %968 = vmatprep.subr.bf16.mxu0 0
    %969 = vmatpush1.bf16.msra.mxu0 0
    %970 = vmatprep.subr.bf16.mxu0 0
    %971 = vmatpush1.bf16.msra.mxu0 0
    %972 = vmatprep.subr.bf16.mxu0 0
    %973 = vmatpush1.bf16.msra.mxu0 0
    %974 = vmatprep.subr.bf16.mxu0 0
    %975 = vmatpush1.bf16.msra.mxu0 0
    %976 = vmatprep.subr.bf16.mxu0 0
    %977 = vmatpush1.bf16.msra.mxu0 0
    %978 = vmatprep.subr.bf16.mxu0 0
    %979 = vmatpush1.bf16.msra.mxu0 0
    %980 = vmatprep.subr.bf16.mxu0 0
    %981 = vmatpush1.bf16.msra.mxu0 0
    %982 = vmatprep.subr.bf16.mxu0 0
    %983 = vmatpush1.bf16.msra.mxu0 0
    %984 = vmatprep.subr.bf16.mxu0 0
    %985 = vmatpush1.bf16.msra.mxu0 0
    %986 = vmatprep.subr.bf16.mxu0 0
    %987 = vmatpush1.bf16.msra.mxu0 0
    %988 = vmatprep.mubr.bf16.mxu0 0
    %989 = vmatmul.mubr.bf16.gmra.mrb[0].mxu0 %v913
    %v990 = vpop.f32.mrb[0].mxu0
    %v991 = vadd.f32 0.0, %v990
    %v992 = vpop.f32.mrb[0].mxu0
    %v993 = vadd.f32 0.0, %v992
    %v994 = vpop.f32.mrb[0].mxu0
    %v995 = vpop.f32.mrb[0].mxu0
    %996 = vdwg.mxu0
    %997 = vmatprep.subr.bf16.mxu0 %v905
    %998 = vmatpush1.bf16.msra.mxu0 %v904
    %999 = vmatprep.subr.bf16.mxu0 0
    %1000 = vmatpush1.bf16.msra.mxu0 0
    %1001 = vmatprep.subr.bf16.mxu0 0
    %1002 = vmatpush1.bf16.msra.mxu0 0
    %1003 = vmatprep.subr.bf16.mxu0 0
    %1004 = vmatpush1.bf16.msra.mxu0 0
    %1005 = vmatprep.subr.bf16.mxu0 0
    %1006 = vmatpush1.bf16.msra.mxu0 0
    %1007 = vmatprep.subr.bf16.mxu0 0
    %1008 = vmatpush1.bf16.msra.mxu0 0
    %1009 = vmatprep.subr.bf16.mxu0 0
    %1010 = vmatpush1.bf16.msra.mxu0 0
    %1011 = vmatprep.subr.bf16.mxu0 0
    %1012 = vmatpush1.bf16.msra.mxu0 0
    %1013 = vmatprep.subr.bf16.mxu0 0
    %1014 = vmatpush1.bf16.msra.mxu0 0
    %1015 = vmatprep.subr.bf16.mxu0 0
    %1016 = vmatpush1.bf16.msra.mxu0 0
    %1017 = vmatprep.subr.bf16.mxu0 0
    %1018 = vmatpush1.bf16.msra.mxu0 0
    %1019 = vmatprep.subr.bf16.mxu0 0
    %1020 = vmatpush1.bf16.msra.mxu0 0
    %1021 = vmatprep.subr.bf16.mxu0 0
    %1022 = vmatpush1.bf16.msra.mxu0 0
    %1023 = vmatprep.subr.bf16.mxu0 0
    %1024 = vmatpush1.bf16.msra.mxu0 0
    %1025 = vmatprep.subr.bf16.mxu0 0
    %1026 = vmatpush1.bf16.msra.mxu0 0
    %1027 = vmatprep.subr.bf16.mxu0 0
    %1028 = vmatpush1.bf16.msra.mxu0 0
    %1029 = vmatprep.mubr.bf16.mxu0 0
    %1030 = vmatmul.mubr.bf16.gmra.mrb[0].mxu0 %v913
    %v1031 = vpop.f32.mrb[0].mxu0
    %v1032 = vadd.f32 0.0, %v1031
    %v1033 = vpop.f32.mrb[0].mxu0
    %v1034 = vadd.f32 0.0, %v1033
    %v1035 = vpop.f32.mrb[0].mxu0
    %v1036 = vpop.f32.mrb[0].mxu0
    %1037 = vdwg.mxu0
    %v1038 = vadd.f32 %v877, %v950
    %v1039 = vadd.f32 %v878, %v952
    %v1040 = vadd.f32 %v879, %v991
    %v1041 = vadd.f32 %v880, %v993
    %v1042 = vadd.f32 %v881, %v1032
    %v1043 = vadd.f32 %v882, %v1034
    %s1044 = scalar_lea.vmem [#allocation5], 24
    %v1045 = vld [vmem:[%s1044] sm:$0xf]
    %1046 = vrot.lane.b32.xlu0 %v83, 92
    %v1047 = vpop.permute.xlu0 %1046
    %1048 = vrot.lane.b32.xlu0 %v84, 92
    %v1049 = vpop.permute.xlu0 %1048
    %1050 = vrot.lane.b32.xlu0 %v85, 92
    %v1051 = vpop.permute.xlu0 %1050
    %1052 = vrot.lane.b32.xlu0 %v86, 92
    %v1053 = vpop.permute.xlu0 %1052
    %1054 = vrot.lane.b32.xlu0 %v87, 92
    %v1055 = vpop.permute.xlu0 %1054
    %1056 = vrot.lane.b32.xlu0 %v88, 92
    %v1057 = vpop.permute.xlu0 %1056
    %1058 = vrot.lane.b32.xlu0 %v89, 92
    %v1059 = vpop.permute.xlu0 %1058
    %vm1060 = vcmask 752640
    %v1061 = vsel %vm1060, %v1047, %v1049
    %v1062 = vsel %vm1060, %v1049, %v1051
    %v1063 = vsel %vm1060, %v1051, %v1053
    %v1064 = vsel %vm1060, %v1053, %v1055
    %v1065 = vsel %vm1060, %v1055, %v1057
    %v1066 = vsel %vm1060, %v1057, %v1059
    %v1074 = vsel %vm117, %v1045, 0
    %1076 = vmatprep.subr.bf16.mxu0 %v1062
    %1077 = vmatpush1.bf16.msra.mxu0 %v1061
    %1078 = vmatprep.subr.bf16.mxu0 0
    %1079 = vmatpush1.bf16.msra.mxu0 0
    %1080 = vmatprep.subr.bf16.mxu0 0
    %1081 = vmatpush1.bf16.msra.mxu0 0
    %1082 = vmatprep.subr.bf16.mxu0 0
    %1083 = vmatpush1.bf16.msra.mxu0 0
    %1084 = vmatprep.subr.bf16.mxu0 0
    %1085 = vmatpush1.bf16.msra.mxu0 0
    %1086 = vmatprep.subr.bf16.mxu0 0
    %1087 = vmatpush1.bf16.msra.mxu0 0
    %1088 = vmatprep.subr.bf16.mxu0 0
    %1089 = vmatpush1.bf16.msra.mxu0 0
    %1090 = vmatprep.subr.bf16.mxu0 0
    %1091 = vmatpush1.bf16.msra.mxu0 0
    %1092 = vmatprep.subr.bf16.mxu0 0
    %1093 = vmatpush1.bf16.msra.mxu0 0
    %1094 = vmatprep.subr.bf16.mxu0 0
    %1095 = vmatpush1.bf16.msra.mxu0 0
    %1096 = vmatprep.subr.bf16.mxu0 0
    %1097 = vmatpush1.bf16.msra.mxu0 0
    %1098 = vmatprep.subr.bf16.mxu0 0
    %1099 = vmatpush1.bf16.msra.mxu0 0
    %1100 = vmatprep.subr.bf16.mxu0 0
    %1101 = vmatpush1.bf16.msra.mxu0 0
    %1102 = vmatprep.subr.bf16.mxu0 0
    %1103 = vmatpush1.bf16.msra.mxu0 0
    %1104 = vmatprep.subr.bf16.mxu0 0
    %1105 = vmatpush1.bf16.msra.mxu0 0
    %1106 = vmatprep.subr.bf16.mxu0 0
    %1107 = vmatpush1.bf16.msra.mxu0 0
    %1108 = vmatprep.mubr.bf16.mxu0 0
    %1109 = vmatmul.mubr.bf16.gmra.mrb[0].mxu0 %v1074
    %v1110 = vpop.f32.mrb[0].mxu0
    %v1111 = vadd.f32 0.0, %v1110
    %v1112 = vpop.f32.mrb[0].mxu0
    %v1113 = vadd.f32 0.0, %v1112
    %v1114 = vpop.f32.mrb[0].mxu0
    %v1115 = vpop.f32.mrb[0].mxu0
    %1116 = vdwg.mxu0
    %1117 = vmatprep.subr.bf16.mxu0 %v1064
    %1118 = vmatpush1.bf16.msra.mxu0 %v1063
    %1119 = vmatprep.subr.bf16.mxu0 0
    %1120 = vmatpush1.bf16.msra.mxu0 0
    %1121 = vmatprep.subr.bf16.mxu0 0
    %1122 = vmatpush1.bf16.msra.mxu0 0
    %1123 = vmatprep.subr.bf16.mxu0 0
    %1124 = vmatpush1.bf16.msra.mxu0 0
    %1125 = vmatprep.subr.bf16.mxu0 0
    %1126 = vmatpush1.bf16.msra.mxu0 0
    %1127 = vmatprep.subr.bf16.mxu0 0
    %1128 = vmatpush1.bf16.msra.mxu0 0
    %1129 = vmatprep.subr.bf16.mxu0 0
    %1130 = vmatpush1.bf16.msra.mxu0 0
    %1131 = vmatprep.subr.bf16.mxu0 0
    %1132 = vmatpush1.bf16.msra.mxu0 0
    %1133 = vmatprep.subr.bf16.mxu0 0
    %1134 = vmatpush1.bf16.msra.mxu0 0
    %1135 = vmatprep.subr.bf16.mxu0 0
    %1136 = vmatpush1.bf16.msra.mxu0 0
    %1137 = vmatprep.subr.bf16.mxu0 0
    %1138 = vmatpush1.bf16.msra.mxu0 0
    %1139 = vmatprep.subr.bf16.mxu0 0
    %1140 = vmatpush1.bf16.msra.mxu0 0
    %1141 = vmatprep.subr.bf16.mxu0 0
    %1142 = vmatpush1.bf16.msra.mxu0 0
    %1143 = vmatprep.subr.bf16.mxu0 0
    %1144 = vmatpush1.bf16.msra.mxu0 0
    %1145 = vmatprep.subr.bf16.mxu0 0
    %1146 = vmatpush1.bf16.msra.mxu0 0
    %1147 = vmatprep.subr.bf16.mxu0 0
    %1148 = vmatpush1.bf16.msra.mxu0 0
    %1149 = vmatprep.mubr.bf16.mxu0 0
    %1150 = vmatmul.mubr.bf16.gmra.mrb[0].mxu0 %v1074
    %v1151 = vpop.f32.mrb[0].mxu0
    %v1152 = vadd.f32 0.0, %v1151
    %v1153 = vpop.f32.mrb[0].mxu0
    %v1154 = vadd.f32 0.0, %v1153
    %v1155 = vpop.f32.mrb[0].mxu0
    %v1156 = vpop.f32.mrb[0].mxu0
    %1157 = vdwg.mxu0
    %1158 = vmatprep.subr.bf16.mxu0 %v1066
    %1159 = vmatpush1.bf16.msra.mxu0 %v1065
    %1160 = vmatprep.subr.bf16.mxu0 0
    %1161 = vmatpush1.bf16.msra.mxu0 0
    %1162 = vmatprep.subr.bf16.mxu0 0
    %1163 = vmatpush1.bf16.msra.mxu0 0
    %1164 = vmatprep.subr.bf16.mxu0 0
    %1165 = vmatpush1.bf16.msra.mxu0 0
    %1166 = vmatprep.subr.bf16.mxu0 0
    %1167 = vmatpush1.bf16.msra.mxu0 0
    %1168 = vmatprep.subr.bf16.mxu0 0
    %1169 = vmatpush1.bf16.msra.mxu0 0
    %1170 = vmatprep.subr.bf16.mxu0 0
    %1171 = vmatpush1.bf16.msra.mxu0 0
    %1172 = vmatprep.subr.bf16.mxu0 0
    %1173 = vmatpush1.bf16.msra.mxu0 0
    %1174 = vmatprep.subr.bf16.mxu0 0
    %1175 = vmatpush1.bf16.msra.mxu0 0
    %1176 = vmatprep.subr.bf16.mxu0 0
    %1177 = vmatpush1.bf16.msra.mxu0 0
    %1178 = vmatprep.subr.bf16.mxu0 0
    %1179 = vmatpush1.bf16.msra.mxu0 0
    %1180 = vmatprep.subr.bf16.mxu0 0
    %1181 = vmatpush1.bf16.msra.mxu0 0
    %1182 = vmatprep.subr.bf16.mxu0 0
    %1183 = vmatpush1.bf16.msra.mxu0 0
    %1184 = vmatprep.subr.bf16.mxu0 0
    %1185 = vmatpush1.bf16.msra.mxu0 0
    %1186 = vmatprep.subr.bf16.mxu0 0
    %1187 = vmatpush1.bf16.msra.mxu0 0
    %1188 = vmatprep.subr.bf16.mxu0 0
    %1189 = vmatpush1.bf16.msra.mxu0 0
    %1190 = vmatprep.mubr.bf16.mxu0 0
    %1191 = vmatmul.mubr.bf16.gmra.mrb[0].mxu0 %v1074
    %v1192 = vpop.f32.mrb[0].mxu0
    %v1193 = vadd.f32 0.0, %v1192
    %v1194 = vpop.f32.mrb[0].mxu0
    %v1195 = vadd.f32 0.0, %v1194
    %v1196 = vpop.f32.mrb[0].mxu0
    %v1197 = vpop.f32.mrb[0].mxu0
    %1198 = vdwg.mxu0
    %v1199 = vadd.f32 %v1038, %v1111
    %v1200 = vadd.f32 %v1039, %v1113
    %v1201 = vadd.f32 %v1040, %v1152
    %v1202 = vadd.f32 %v1041, %v1154
    %v1203 = vadd.f32 %v1042, %v1193
    %v1204 = vadd.f32 %v1043, %v1195
    %s1205 = scalar_lea.vmem [#allocation5], 28
    %v1206 = vld [vmem:[%s1205] sm:$0xf]
    %1207 = vrot.lane.b32.xlu0 %v83, 91
    %v1208 = vpop.permute.xlu0 %1207
    %1209 = vrot.lane.b32.xlu0 %v84, 91
    %v1210 = vpop.permute.xlu0 %1209
    %1211 = vrot.lane.b32.xlu0 %v85, 91
    %v1212 = vpop.permute.xlu0 %1211
    %1213 = vrot.lane.b32.xlu0 %v86, 91
    %v1214 = vpop.permute.xlu0 %1213
    %1215 = vrot.lane.b32.xlu0 %v87, 91
    %v1216 = vpop.permute.xlu0 %1215
    %1217 = vrot.lane.b32.xlu0 %v88, 91
    %v1218 = vpop.permute.xlu0 %1217
    %1219 = vrot.lane.b32.xlu0 %v89, 91
    %v1220 = vpop.permute.xlu0 %1219
    %vm1221 = vcmask 744448
    %v1222 = vsel %vm1221, %v1208, %v1210
    %v1223 = vsel %vm1221, %v1210, %v1212
    %v1224 = vsel %vm1221, %v1212, %v1214
    %v1225 = vsel %vm1221, %v1214, %v1216
    %v1226 = vsel %vm1221, %v1216, %v1218
    %v1227 = vsel %vm1221, %v1218, %v1220
    %v1235 = vsel %vm117, %v1206, 0
    %1237 = vmatprep.subr.bf16.mxu0 %v1223
    %1238 = vmatpush1.bf16.msra.mxu0 %v1222
    %1239 = vmatprep.subr.bf16.mxu0 0
    %1240 = vmatpush1.bf16.msra.mxu0 0
    %1241 = vmatprep.subr.bf16.mxu0 0
    %1242 = vmatpush1.bf16.msra.mxu0 0
    %1243 = vmatprep.subr.bf16.mxu0 0
    %1244 = vmatpush1.bf16.msra.mxu0 0
    %1245 = vmatprep.subr.bf16.mxu0 0
    %1246 = vmatpush1.bf16.msra.mxu0 0
    %1247 = vmatprep.subr.bf16.mxu0 0
    %1248 = vmatpush1.bf16.msra.mxu0 0
    %1249 = vmatprep.subr.bf16.mxu0 0
    %1250 = vmatpush1.bf16.msra.mxu0 0
    %1251 = vmatprep.subr.bf16.mxu0 0
    %1252 = vmatpush1.bf16.msra.mxu0 0
    %1253 = vmatprep.subr.bf16.mxu0 0
    %1254 = vmatpush1.bf16.msra.mxu0 0
    %1255 = vmatprep.subr.bf16.mxu0 0
    %1256 = vmatpush1.bf16.msra.mxu0 0
    %1257 = vmatprep.subr.bf16.mxu0 0
    %1258 = vmatpush1.bf16.msra.mxu0 0
    %1259 = vmatprep.subr.bf16.mxu0 0
    %1260 = vmatpush1.bf16.msra.mxu0 0
    %1261 = vmatprep.subr.bf16.mxu0 0
    %1262 = vmatpush1.bf16.msra.mxu0 0
    %1263 = vmatprep.subr.bf16.mxu0 0
    %1264 = vmatpush1.bf16.msra.mxu0 0
    %1265 = vmatprep.subr.bf16.mxu0 0
    %1266 = vmatpush1.bf16.msra.mxu0 0
    %1267 = vmatprep.subr.bf16.mxu0 0
    %1268 = vmatpush1.bf16.msra.mxu0 0
    %1269 = vmatprep.mubr.bf16.mxu0 0
    %1270 = vmatmul.mubr.bf16.gmra.mrb[0].mxu0 %v1235
    %v1271 = vpop.f32.mrb[0].mxu0
    %v1272 = vadd.f32 0.0, %v1271
    %v1273 = vpop.f32.mrb[0].mxu0
    %v1274 = vadd.f32 0.0, %v1273
    %v1275 = vpop.f32.mrb[0].mxu0
    %v1276 = vpop.f32.mrb[0].mxu0
    %1277 = vdwg.mxu0
    %1278 = vmatprep.subr.bf16.mxu0 %v1225
    %1279 = vmatpush1.bf16.msra.mxu0 %v1224
    %1280 = vmatprep.subr.bf16.mxu0 0
    %1281 = vmatpush1.bf16.msra.mxu0 0
    %1282 = vmatprep.subr.bf16.mxu0 0
    %1283 = vmatpush1.bf16.msra.mxu0 0
    %1284 = vmatprep.subr.bf16.mxu0 0
    %1285 = vmatpush1.bf16.msra.mxu0 0
    %1286 = vmatprep.subr.bf16.mxu0 0
    %1287 = vmatpush1.bf16.msra.mxu0 0
    %1288 = vmatprep.subr.bf16.mxu0 0
    %1289 = vmatpush1.bf16.msra.mxu0 0
    %1290 = vmatprep.subr.bf16.mxu0 0
    %1291 = vmatpush1.bf16.msra.mxu0 0
    %1292 = vmatprep.subr.bf16.mxu0 0
    %1293 = vmatpush1.bf16.msra.mxu0 0
    %1294 = vmatprep.subr.bf16.mxu0 0
    %1295 = vmatpush1.bf16.msra.mxu0 0
    %1296 = vmatprep.subr.bf16.mxu0 0
    %1297 = vmatpush1.bf16.msra.mxu0 0
    %1298 = vmatprep.subr.bf16.mxu0 0
    %1299 = vmatpush1.bf16.msra.mxu0 0
    %1300 = vmatprep.subr.bf16.mxu0 0
    %1301 = vmatpush1.bf16.msra.mxu0 0
    %1302 = vmatprep.subr.bf16.mxu0 0
    %1303 = vmatpush1.bf16.msra.mxu0 0
    %1304 = vmatprep.subr.bf16.mxu0 0
    %1305 = vmatpush1.bf16.msra.mxu0 0
    %1306 = vmatprep.subr.bf16.mxu0 0
    %1307 = vmatpush1.bf16.msra.mxu0 0
    %1308 = vmatprep.subr.bf16.mxu0 0
    %1309 = vmatpush1.bf16.msra.mxu0 0
    %1310 = vmatprep.mubr.bf16.mxu0 0
    %1311 = vmatmul.mubr.bf16.gmra.mrb[0].mxu0 %v1235
    %v1312 = vpop.f32.mrb[0].mxu0
    %v1313 = vadd.f32 0.0, %v1312
    %v1314 = vpop.f32.mrb[0].mxu0
    %v1315 = vadd.f32 0.0, %v1314
    %v1316 = vpop.f32.mrb[0].mxu0
    %v1317 = vpop.f32.mrb[0].mxu0
    %1318 = vdwg.mxu0
    %1319 = vmatprep.subr.bf16.mxu0 %v1227
    %1320 = vmatpush1.bf16.msra.mxu0 %v1226
    %1321 = vmatprep.subr.bf16.mxu0 0
    %1322 = vmatpush1.bf16.msra.mxu0 0
    %1323 = vmatprep.subr.bf16.mxu0 0
    %1324 = vmatpush1.bf16.msra.mxu0 0
    %1325 = vmatprep.subr.bf16.mxu0 0
    %1326 = vmatpush1.bf16.msra.mxu0 0
    %1327 = vmatprep.subr.bf16.mxu0 0
    %1328 = vmatpush1.bf16.msra.mxu0 0
    %1329 = vmatprep.subr.bf16.mxu0 0
    %1330 = vmatpush1.bf16.msra.mxu0 0
    %1331 = vmatprep.subr.bf16.mxu0 0
    %1332 = vmatpush1.bf16.msra.mxu0 0
    %1333 = vmatprep.subr.bf16.mxu0 0
    %1334 = vmatpush1.bf16.msra.mxu0 0
    %1335 = vmatprep.subr.bf16.mxu0 0
    %1336 = vmatpush1.bf16.msra.mxu0 0
    %1337 = vmatprep.subr.bf16.mxu0 0
    %1338 = vmatpush1.bf16.msra.mxu0 0
    %1339 = vmatprep.subr.bf16.mxu0 0
    %1340 = vmatpush1.bf16.msra.mxu0 0
    %1341 = vmatprep.subr.bf16.mxu0 0
    %1342 = vmatpush1.bf16.msra.mxu0 0
    %1343 = vmatprep.subr.bf16.mxu0 0
    %1344 = vmatpush1.bf16.msra.mxu0 0
    %1345 = vmatprep.subr.bf16.mxu0 0
    %1346 = vmatpush1.bf16.msra.mxu0 0
    %1347 = vmatprep.subr.bf16.mxu0 0
    %1348 = vmatpush1.bf16.msra.mxu0 0
    %1349 = vmatprep.subr.bf16.mxu0 0
    %1350 = vmatpush1.bf16.msra.mxu0 0
    %1351 = vmatprep.mubr.bf16.mxu0 0
    %1352 = vmatmul.mubr.bf16.gmra.mrb[0].mxu0 %v1235
    %v1353 = vpop.f32.mrb[0].mxu0
    %v1354 = vadd.f32 0.0, %v1353
    %v1355 = vpop.f32.mrb[0].mxu0
    %v1356 = vadd.f32 0.0, %v1355
    %v1357 = vpop.f32.mrb[0].mxu0
    %v1358 = vpop.f32.mrb[0].mxu0
    %1359 = vdwg.mxu0
    %v1360 = vadd.f32 %v1199, %v1272
    %v1361 = vadd.f32 %v1200, %v1274
    %v1362 = vadd.f32 %v1201, %v1313
    %v1363 = vadd.f32 %v1202, %v1315
    %v1364 = vadd.f32 %v1203, %v1354
    %v1365 = vadd.f32 %v1204, %v1356
    %s1366 = scalar_lea.vmem [#allocation5], 32
    %v1367 = vld [vmem:[%s1366] sm:$0xf]
    %1368 = vrot.lane.b32.xlu0 %v83, 90
    %v1369 = vpop.permute.xlu0 %1368
    %1370 = vrot.lane.b32.xlu0 %v84, 90
    %v1371 = vpop.permute.xlu0 %1370
    %1372 = vrot.lane.b32.xlu0 %v85, 90
    %v1373 = vpop.permute.xlu0 %1372
    %1374 = vrot.lane.b32.xlu0 %v86, 90
    %v1375 = vpop.permute.xlu0 %1374
    %1376 = vrot.lane.b32.xlu0 %v87, 90
    %v1377 = vpop.permute.xlu0 %1376
    %1378 = vrot.lane.b32.xlu0 %v88, 90
    %v1379 = vpop.permute.xlu0 %1378
    %1380 = vrot.lane.b32.xlu0 %v89, 90
    %v1381 = vpop.permute.xlu0 %1380
    %vm1382 = vcmask 736256
    %v1383 = vsel %vm1382, %v1369, %v1371
    %v1384 = vsel %vm1382, %v1371, %v1373
    %v1385 = vsel %vm1382, %v1373, %v1375
    %v1386 = vsel %vm1382, %v1375, %v1377
    %v1387 = vsel %vm1382, %v1377, %v1379
    %v1388 = vsel %vm1382, %v1379, %v1381
    %v1396 = vsel %vm117, %v1367, 0
    %1398 = vmatprep.subr.bf16.mxu0 %v1384
    %1399 = vmatpush1.bf16.msra.mxu0 %v1383
    %1400 = vmatprep.subr.bf16.mxu0 0
    %1401 = vmatpush1.bf16.msra.mxu0 0
    %1402 = vmatprep.subr.bf16.mxu0 0
    %1403 = vmatpush1.bf16.msra.mxu0 0
    %1404 = vmatprep.subr.bf16.mxu0 0
    %1405 = vmatpush1.bf16.msra.mxu0 0
    %1406 = vmatprep.subr.bf16.mxu0 0
    %1407 = vmatpush1.bf16.msra.mxu0 0
    %1408 = vmatprep.subr.bf16.mxu0 0
    %1409 = vmatpush1.bf16.msra.mxu0 0
    %1410 = vmatprep.subr.bf16.mxu0 0
    %1411 = vmatpush1.bf16.msra.mxu0 0
    %1412 = vmatprep.subr.bf16.mxu0 0
    %1413 = vmatpush1.bf16.msra.mxu0 0
    %1414 = vmatprep.subr.bf16.mxu0 0
    %1415 = vmatpush1.bf16.msra.mxu0 0
    %1416 = vmatprep.subr.bf16.mxu0 0
    %1417 = vmatpush1.bf16.msra.mxu0 0
    %1418 = vmatprep.subr.bf16.mxu0 0
    %1419 = vmatpush1.bf16.msra.mxu0 0
    %1420 = vmatprep.subr.bf16.mxu0 0
    %1421 = vmatpush1.bf16.msra.mxu0 0
    %1422 = vmatprep.subr.bf16.mxu0 0
    %1423 = vmatpush1.bf16.msra.mxu0 0
    %1424 = vmatprep.subr.bf16.mxu0 0
    %1425 = vmatpush1.bf16.msra.mxu0 0
    %1426 = vmatprep.subr.bf16.mxu0 0
    %1427 = vmatpush1.bf16.msra.mxu0 0
    %1428 = vmatprep.subr.bf16.mxu0 0
    %1429 = vmatpush1.bf16.msra.mxu0 0
    %1430 = vmatprep.mubr.bf16.mxu0 0
    %1431 = vmatmul.mubr.bf16.gmra.mrb[0].mxu0 %v1396
    %v1432 = vpop.f32.mrb[0].mxu0
    %v1433 = vadd.f32 0.0, %v1432
    %v1434 = vpop.f32.mrb[0].mxu0
    %v1435 = vadd.f32 0.0, %v1434
    %v1436 = vpop.f32.mrb[0].mxu0
    %v1437 = vpop.f32.mrb[0].mxu0
    %1438 = vdwg.mxu0
    %1439 = vmatprep.subr.bf16.mxu0 %v1386
    %1440 = vmatpush1.bf16.msra.mxu0 %v1385
    %1441 = vmatprep.subr.bf16.mxu0 0
    %1442 = vmatpush1.bf16.msra.mxu0 0
    %1443 = vmatprep.subr.bf16.mxu0 0
    %1444 = vmatpush1.bf16.msra.mxu0 0
    %1445 = vmatprep.subr.bf16.mxu0 0
    %1446 = vmatpush1.bf16.msra.mxu0 0
    %1447 = vmatprep.subr.bf16.mxu0 0
    %1448 = vmatpush1.bf16.msra.mxu0 0
    %1449 = vmatprep.subr.bf16.mxu0 0
    %1450 = vmatpush1.bf16.msra.mxu0 0
    %1451 = vmatprep.subr.bf16.mxu0 0
    %1452 = vmatpush1.bf16.msra.mxu0 0
    %1453 = vmatprep.subr.bf16.mxu0 0
    %1454 = vmatpush1.bf16.msra.mxu0 0
    %1455 = vmatprep.subr.bf16.mxu0 0
    %1456 = vmatpush1.bf16.msra.mxu0 0
    %1457 = vmatprep.subr.bf16.mxu0 0
    %1458 = vmatpush1.bf16.msra.mxu0 0
    %1459 = vmatprep.subr.bf16.mxu0 0
    %1460 = vmatpush1.bf16.msra.mxu0 0
    %1461 = vmatprep.subr.bf16.mxu0 0
    %1462 = vmatpush1.bf16.msra.mxu0 0
    %1463 = vmatprep.subr.bf16.mxu0 0
    %1464 = vmatpush1.bf16.msra.mxu0 0
    %1465 = vmatprep.subr.bf16.mxu0 0
    %1466 = vmatpush1.bf16.msra.mxu0 0
    %1467 = vmatprep.subr.bf16.mxu0 0
    %1468 = vmatpush1.bf16.msra.mxu0 0
    %1469 = vmatprep.subr.bf16.mxu0 0
    %1470 = vmatpush1.bf16.msra.mxu0 0
    %1471 = vmatprep.mubr.bf16.mxu0 0
    %1472 = vmatmul.mubr.bf16.gmra.mrb[0].mxu0 %v1396
    %v1473 = vpop.f32.mrb[0].mxu0
    %v1474 = vadd.f32 0.0, %v1473
    %v1475 = vpop.f32.mrb[0].mxu0
    %v1476 = vadd.f32 0.0, %v1475
    %v1477 = vpop.f32.mrb[0].mxu0
    %v1478 = vpop.f32.mrb[0].mxu0
    %1479 = vdwg.mxu0
    %1480 = vmatprep.subr.bf16.mxu0 %v1388
    %1481 = vmatpush1.bf16.msra.mxu0 %v1387
    %1482 = vmatprep.subr.bf16.mxu0 0
    %1483 = vmatpush1.bf16.msra.mxu0 0
    %1484 = vmatprep.subr.bf16.mxu0 0
    %1485 = vmatpush1.bf16.msra.mxu0 0
    %1486 = vmatprep.subr.bf16.mxu0 0
    %1487 = vmatpush1.bf16.msra.mxu0 0
    %1488 = vmatprep.subr.bf16.mxu0 0
    %1489 = vmatpush1.bf16.msra.mxu0 0
    %1490 = vmatprep.subr.bf16.mxu0 0
    %1491 = vmatpush1.bf16.msra.mxu0 0
    %1492 = vmatprep.subr.bf16.mxu0 0
    %1493 = vmatpush1.bf16.msra.mxu0 0
    %1494 = vmatprep.subr.bf16.mxu0 0
    %1495 = vmatpush1.bf16.msra.mxu0 0
    %1496 = vmatprep.subr.bf16.mxu0 0
    %1497 = vmatpush1.bf16.msra.mxu0 0
    %1498 = vmatprep.subr.bf16.mxu0 0
    %1499 = vmatpush1.bf16.msra.mxu0 0
    %1500 = vmatprep.subr.bf16.mxu0 0
    %1501 = vmatpush1.bf16.msra.mxu0 0
    %1502 = vmatprep.subr.bf16.mxu0 0
    %1503 = vmatpush1.bf16.msra.mxu0 0
    %1504 = vmatprep.subr.bf16.mxu0 0
    %1505 = vmatpush1.bf16.msra.mxu0 0
    %1506 = vmatprep.subr.bf16.mxu0 0
    %1507 = vmatpush1.bf16.msra.mxu0 0
    %1508 = vmatprep.subr.bf16.mxu0 0
    %1509 = vmatpush1.bf16.msra.mxu0 0
    %1510 = vmatprep.subr.bf16.mxu0 0
    %1511 = vmatpush1.bf16.msra.mxu0 0
    %1512 = vmatprep.mubr.bf16.mxu0 0
    %1513 = vmatmul.mubr.bf16.gmra.mrb[0].mxu0 %v1396
    %v1514 = vpop.f32.mrb[0].mxu0
    %v1515 = vadd.f32 0.0, %v1514
    %v1516 = vpop.f32.mrb[0].mxu0
    %v1517 = vadd.f32 0.0, %v1516
    %v1518 = vpop.f32.mrb[0].mxu0
    %v1519 = vpop.f32.mrb[0].mxu0
    %1520 = vdwg.mxu0
    %v1521 = vadd.f32 %v1360, %v1433
    %v1522 = vadd.f32 %v1361, %v1435
    %v1523 = vadd.f32 %v1362, %v1474
    %v1524 = vadd.f32 %v1363, %v1476
    %v1525 = vadd.f32 %v1364, %v1515
    %v1526 = vadd.f32 %v1365, %v1517
    %v1527 = vld [vmem:[%s2] sm:$0xff]
    %1529 = vset.pattern.permute.xlu0 0
    %1530 = vperm.xlu0 %1529, %v1527
    %v1531 = vpop.permute.xlu0 %1530
    %v1533 = vadd.f32 %v1521, %v1531
    %v1534 = vadd.f32 %v1522, %v1531
    %v1535 = vadd.f32 %v1523, %v1531
    %v1536 = vadd.f32 %v1524, %v1531
    %v1537 = vadd.f32 %v1525, %v1531
    %v1538 = vadd.f32 %v1526, %v1531
    %1539 = vst [vmem:[#allocation7] sm:$0xff] %v1533
    %1540 = vst [vmem:[#allocation7 + $0x8] sm:$0xff] %v1534
    %1541 = vst [vmem:[#allocation7 + $0x10] sm:$0xff] %v1535
    %1542 = vst [vmem:[#allocation7 + $0x18] sm:$0xff] %v1536
    %1543 = vst [vmem:[#allocation7 + $0x20] sm:$0xff] %v1537
    %1544 = vst [vmem:[#allocation7 + $0x28] sm:$0xff] %v1538
    // Predicated region
    $region22: #{tpu_custom_call.1} parent=1 // pred_check
      _
    $region23: #{tpu_custom_call.1} parent=1 // pred_check_branch
      %1546 = sbr.rel (0) target = $region25
    $region24: #{tpu_custom_call.1} parent=1 // pred_region
      %s1548 = ssub.s32 768, 768
      %1549 = vsyncadd [#allocation4], %s1548
      %s1551 = sshll.u32 [#allocation7], 4
      %s1552 = int_to_ptr.vmem [resolvable:$true] %s1551
      %1554 = dma.vmem_to_hbm [thread:$0]  %s1552, 768, %s3, [#allocation4]
    $region25: #{tpu_custom_call.1} parent=1 // pred_fallthru
      _
    // Predicated region
    $region26: #{tpu_custom_call.1} parent=1 // pred_check
      _
    $region27: #{tpu_custom_call.1} parent=1 // pred_check_branch
      %1556 = sbr.rel (0) target = $region29
    $region28: #{tpu_custom_call.1} parent=1 // pred_region
      %1557 = dma.done [#allocation4], 768
    $region29: #{tpu_custom_call.1} parent=1 // pred_fallthru
      _
    %1558 = vsyncpa [#allocation3], 1
    %1559 = vsyncpa [#allocation6], 1
    %1560 = vsyncpa [#allocation4], 1

</llo_original>
